<compile_context>
chip_gen: v7x
topology: tpu7x:2x2x1
jax: 0.10.0
libtpu: 0.0.40
codegen_flags: <defaults>
</compile_context>

<pallas_src>
import math
import functools

import jax
import jax.numpy as jnp
import numpy as np
from jax.experimental import pallas as pl
from jax.experimental.pallas import tpu as pltpu


_TWO_PI = 2.0 * math.pi
_INV_TWO_PI = 1.0 / _TWO_PI


def _ipd_kernel(index_l, index_r, cos, sin, p_ref, out_ref):
    """p_ref: (1, C, Ft, Tt) phase block; out_ref: (1, M, S, Ft, Tt) IPD block.

    Pair indices are compile-time Python ints -> static channel slices of the
    VMEM block.  Channels are reloaded per pair (VMEM loads are nearly free)
    so only two f32 slabs are live at a time (no vreg spills).
    """
    for m, (il, ir) in enumerate(zip(index_l, index_r)):
        a = p_ref[0, il, :, :].astype(jnp.float32)
        b = p_ref[0, ir, :, :].astype(jnp.float32)
        dif = a - b
        if cos:
            out_ref[0, m, 0, :, :] = jnp.cos(dif).astype(out_ref.dtype)
            if sin:
                out_ref[0, m, 1, :, :] = jnp.sin(dif).astype(out_ref.dtype)
        else:
            # fmod(dif, 2*pi) - pi with the divide strength-reduced to a
            # constant multiply (exact for |dif| < 2*pi, i.e. wrapped phases).
            wrapped = dif - _TWO_PI * jnp.trunc(dif * _INV_TWO_PI)
            out_ref[0, m, 0, :, :] = (wrapped - math.pi).astype(out_ref.dtype)


def _ipd_kernel_sincos(index_l, index_r, chans, sin, p_ref, out_ref, cs_ref):
    """Transcendental-saving variant (cos path only).

    Per-channel cos/sin are computed once into VMEM scratch, then each pair is
    plain VPU mul/add:  cos(a-b)=ca*cb+sa*sb,  sin(a-b)=sa*cb-ca*sb.
    Used when 2*|channels| < M*S (all-pairs index / cos+sin configs), where
    v7x is VPU/EUP-bound rather than HBM-bound.
    """
    pos = {c: i for i, c in enumerate(chans)}
    for ci, c in enumerate(chans):
        x = p_ref[0, c, :, :].astype(jnp.float32)
        cs_ref[ci, 0, :, :] = jnp.cos(x)
        cs_ref[ci, 1, :, :] = jnp.sin(x)
    for m, (il, ir) in enumerate(zip(index_l, index_r)):
        ca = cs_ref[pos[il], 0, :, :]
        sa = cs_ref[pos[il], 1, :, :]
        cb = cs_ref[pos[ir], 0, :, :]
        sb = cs_ref[pos[ir], 1, :, :]
        out_ref[0, m, 0, :, :] = (ca * cb + sa * sb).astype(out_ref.dtype)
        if sin:
            out_ref[0, m, 1, :, :] = (sa * cb - ca * sb).astype(out_ref.dtype)


def _vmem_budget_and_limit():
    """Generation-aware (VMEM-capacity-based) tiling budget and scoped limit."""
    try:
        cap = pltpu.get_tpu_info().vmem_capacity_bytes
    except Exception:  # query unavailable -> conservative, v7x-safe numbers
        cap = 64 * 1024 * 1024
    if cap <= 64 * 1024 * 1024:
        # v7x: 64 MiB per TensorCore -> leave headroom for compiler scratch.
        return 28 * 1024 * 1024, 48 * 1024 * 1024
    # v5e / v6e: 128 MiB -> bigger tiles push closer to the HBM roofline.
    return 80 * 1024 * 1024, 100 * 1024 * 1024


def _choose_tiles(Fdim, T_pad, C, M, S, itemsize, budget, scratch_f32_slabs):
    """Lane-dense T tile (multiple of 128); F tiled (multiple of 8) only as a
    fallback when even a 128-wide full-F block exceeds the VMEM budget."""

    def block_bytes(ft, tt):
        io = 2 * (C + M * S) * ft * tt * itemsize       # double-buffered in+out
        return io + scratch_f32_slabs * ft * tt * 4     # + f32 scratch

    f_tile = Fdim
    t_tile = min((T_pad // 128) * 128, 2048)
    while t_tile > 128 and block_bytes(f_tile, t_tile) > budget:
        t_tile -= 128
    if block_bytes(f_tile, t_tile) > budget and Fdim > 8:
        f_tile = (Fdim // 8) * 8
        while f_tile > 8 and block_bytes(f_tile, t_tile) > budget:
            f_tile -= 8
    return f_tile, t_tile


def ipd_feature(p, ipd_index='1,0;2,0;3,0;4,0;5,0;6,0', cos=True, sin=False):
    """JAX/Pallas equivalent of IPDFeature.forward.

    args:
        p: phase matrix, (N, C, F, T) or (C, F, T)
    returns:
        ipd: (N, M*F', T) with F' = 2F if (cos and sin) else F
    """
    if p.ndim not in (3, 4):
        raise RuntimeError(
            'IPDFeature expects 3/4D tensor, but got {:d} instead'.format(p.ndim))
    if p.ndim == 3:
        p = p[None]

    pair = [tuple(map(int, q.split(','))) for q in ipd_index.split(';')]
    index_l = tuple(t[0] for t in pair)
    index_r = tuple(t[1] for t in pair)
    M = len(pair)
    S = 2 if (cos and sin) else 1
    chans = tuple(sorted(set(index_l) | set(index_r)))

    N, C, Fdim, T = p.shape

    # Trim trailing channels never referenced by ipd_index (cuts HBM reads on
    # memory-bound chips; contiguous slice, indices stay valid).
    c_used = max(chans) + 1
    if c_used < C:
        p = p[:, :c_used]
        C = c_used

    # Lane-dense output stores: pad very short T up to one 128-lane tile
    # (unmasked vst instead of masked vst.msk); sliced off after the call.
    T_pad = T if T >= 128 else 128
    if T_pad != T:
        p = jnp.pad(p, ((0, 0), (0, 0), (0, 0), (0, T_pad - T)))

    itemsize = jnp.dtype(p.dtype).itemsize

    # Transcendental-saving decomposition pays when pairs >> channels.
    use_sincos = cos and (2 * len(chans) < M * S)
    scratch_slabs = 2 * len(chans) if use_sincos else 0

    budget, limit_cap = _vmem_budget_and_limit()
    F_tile, T_tile = _choose_tiles(Fdim, T_pad, C, M, S, itemsize,
                                   budget, scratch_slabs)

    # v7x megacore: guarantee >= 2 grid steps on a parallel axis when N == 1
    # (neutral on single-TensorCore v5e / v6e).
    if N == 1 and pl.cdiv(Fdim, F_tile) * pl.cdiv(T_pad, T_tile) == 1:
        if T_tile >= 256:
            T_tile = (T_tile // 2 // 128) * 128
        elif Fdim >= 16:
            F_tile = ((Fdim + 1) // 2 + 7) // 8 * 8

    grid = (N, pl.cdiv(Fdim, F_tile), pl.cdiv(T_pad, T_tile))

    block_bytes = (2 * (C + M * S) * itemsize + scratch_slabs * 4) * F_tile * T_tile
    vmem_limit = int(min(limit_cap, max(4 * 1024 * 1024, 2 * block_bytes)))
    vmem_limit = int(max(vmem_limit, block_bytes + (1 << 20)))

    if use_sincos:
        kernel = functools.partial(_ipd_kernel_sincos, index_l, index_r, chans, sin)
        scratch_shapes = [pltpu.VMEM((len(chans), 2, F_tile, T_tile), jnp.float32)]
    else:
        kernel = functools.partial(_ipd_kernel, index_l, index_r, cos, sin)
        scratch_shapes = []

    nelem = N * Fdim * T_pad
    cost = pl.CostEstimate(
        flops=6 * M * S * nelem,
        transcendentals=(2 * len(chans) if use_sincos else M * S) * nelem,
        bytes_accessed=(C + M * S) * nelem * itemsize)

    out = pl.pallas_call(
        kernel,
        out_shape=jax.ShapeDtypeStruct((N, M, S, Fdim, T_pad), p.dtype),
        grid=grid,
        in_specs=[
            # full channel dim resident; N, F, T tiled
            pl.BlockSpec((1, C, F_tile, T_tile), lambda n, f, t: (n, 0, f, t)),
        ],
        out_specs=pl.BlockSpec((1, M, S, F_tile, T_tile),
                               lambda n, f, t: (n, 0, 0, f, t)),
        scratch_shapes=scratch_shapes,
        compiler_params=pltpu.CompilerParams(
            dimension_semantics=("parallel", "parallel", "parallel"),
            vmem_limit_bytes=vmem_limit),
        cost_estimate=cost,
    )(p)

    if T_pad != T:
        out = out[..., :T]
    # (N, M, S, F, T) -> (N, M*S*F, T): contiguous reshape, identical ordering
    # to torch.cat([cos, sin], dim=2).view(N, -1, T).
    return out.reshape(N, M * S * Fdim, T)


def ipd_feature_ref(p, ipd_index='1,0;2,0;3,0;4,0;5,0;6,0', cos=True, sin=False):
    """Pure-JAX reference mirroring the PyTorch module exactly."""
    if p.ndim == 3:
        p = p[None]
    pair = [tuple(map(int, q.split(','))) for q in ipd_index.split(';')]
    il = [t[0] for t in pair]
    ir = [t[1] for t in pair]
    N, _, _, T = p.shape
    pha_dif = p[:, il] - p[:, ir]
    if cos:
        ipd = jnp.cos(pha_dif)
        if sin:
            ipd = jnp.concatenate([ipd, jnp.sin(pha_dif)], axis=2)
    else:
        ipd = jnp.fmod(pha_dif, 2.0 * math.pi) - math.pi
    return ipd.reshape(N, -1, T)


if __name__ == "__main__":
    # Default ipd_index references channels 0..6 -> need C >= 7.
    N, C, F, T = 2, 7, 16, 128
    key = jax.random.PRNGKey(0)
    # phases in [-pi, pi)
    p = jax.random.uniform(key, (N, C, F, T), dtype=jnp.float32,
                           minval=-math.pi, maxval=math.pi)

    # module defaults: cos=True, sin=False
    out = jax.block_until_ready(ipd_feature(p))
    ref = ipd_feature_ref(p)
    assert out.shape == (N, 6 * F, T), out.shape
    np.testing.assert_allclose(np.asarray(out), np.asarray(ref),
                               rtol=1e-5, atol=1e-5)

    # cos + sin path (output width doubles, split kept sublane-aligned)
    out_cs = jax.block_until_ready(ipd_feature(p, cos=True, sin=True))
    ref_cs = ipd_feature_ref(p, cos=True, sin=True)
    assert out_cs.shape == (N, 12 * F, T), out_cs.shape
    np.testing.assert_allclose(np.asarray(out_cs), np.asarray(ref_cs),
                               rtol=1e-5, atol=1e-5)

    # fmod path: inputs are wrapped phases (|dif| < 2*pi) so the strength-
    # reduced fmod is exact; compare against the reference directly.
    out_fm = jax.block_until_ready(ipd_feature(p, cos=False))
    ref_fm = ipd_feature_ref(p, cos=False)
    assert out_fm.shape == (N, 6 * F, T), out_fm.shape
    np.testing.assert_allclose(np.asarray(out_fm), np.asarray(ref_fm),
                               rtol=1e-5, atol=1e-5)

    # short-T path: wrapper pads T to 128 for lane-dense stores, slices after
    p_short = p[..., :96]
    out_sh = jax.block_until_ready(ipd_feature(p_short))
    ref_sh = ipd_feature_ref(p_short)
    assert out_sh.shape == (N, 6 * F, 96), out_sh.shape
    np.testing.assert_allclose(np.asarray(out_sh), np.asarray(ref_sh),
                               rtol=1e-5, atol=1e-5)

    # all-pairs index + cos+sin on 4 channels -> exercises the sincos
    # channel-decomposition kernel (2*|chans|=8 < M*S=12)
    p4 = p[:, :4]
    idx_all = '1,0;2,0;3,0;2,1;3,1;3,2'
    out_ap = jax.block_until_ready(ipd_feature(p4, ipd_index=idx_all,
                                               cos=True, sin=True))
    ref_ap = ipd_feature_ref(p4, ipd_index=idx_all, cos=True, sin=True)
    assert out_ap.shape == (N, 12 * F, T), out_ap.shape
    np.testing.assert_allclose(np.asarray(out_ap), np.asarray(ref_ap),
                               rtol=1e-5, atol=1e-5)

    print("KERNEL_OK")
</pallas_src>

<mosaic_0001>
module attributes {stable_mosaic.version = 11 : i64} {
  func.func @_ipd_kernel(%arg0: i32, %arg1: i32, %arg2: i32, %arg3: memref<1x7x16x128xf32, #tpu.memory_space<vmem>>, %arg4: memref<1x6x1x16x128xf32, #tpu.memory_space<vmem>>) attributes {dimension_semantics = [#tpu.dimension_semantics<parallel>, #tpu.dimension_semantics<parallel>, #tpu.dimension_semantics<parallel>], iteration_bounds = array<i64: 2, 1, 1>, scalar_prefetch = 0 : i64, scratch_operands = 0 : i64, tpu.core_type = #tpu.core_type<tc>, window_params = [{transform_indices = @transform_0, window_bounds = array<i64: 1, 7, 16, 128>}, {transform_indices = @transform_1, window_bounds = array<i64: 1, 6, 1, 16, 128>}]} {
    %c0 = arith.constant 0 : index
    %c1 = arith.constant 1 : index
    %c0_0 = arith.constant 0 : index
    %c0_1 = arith.constant 0 : index
    %0 = vector.load %arg3[%c0, %c1, %c0_0, %c0_1] : memref<1x7x16x128xf32, #tpu.memory_space<vmem>>, vector<1x1x16x128xf32>
    %1 = vector.shape_cast %0 : vector<1x1x16x128xf32> to vector<16x128xf32>
    %c0_2 = arith.constant 0 : index
    %c0_3 = arith.constant 0 : index
    %c0_4 = arith.constant 0 : index
    %c0_5 = arith.constant 0 : index
    %2 = vector.load %arg3[%c0_2, %c0_3, %c0_4, %c0_5] : memref<1x7x16x128xf32, #tpu.memory_space<vmem>>, vector<1x1x16x128xf32>
    %3 = vector.shape_cast %2 : vector<1x1x16x128xf32> to vector<16x128xf32>
    %4 = arith.subf %1, %3 : vector<16x128xf32>
    %5 = math.cos %4 : vector<16x128xf32>
    %c0_6 = arith.constant 0 : index
    %c0_7 = arith.constant 0 : index
    %c0_8 = arith.constant 0 : index
    %c0_9 = arith.constant 0 : index
    %c0_10 = arith.constant 0 : index
    %6 = vector.load %arg4[%c0_6, %c0_7, %c0_8, %c0_9, %c0_10] : memref<1x6x1x16x128xf32, #tpu.memory_space<vmem>>, vector<1x1x1x16x128xf32>
    %7 = vector.shape_cast %6 : vector<1x1x1x16x128xf32> to vector<16x128xf32>
    %8 = vector.shape_cast %5 : vector<16x128xf32> to vector<1x1x1x16x128xf32>
    tpu.vector_store %arg4[%c0_6, %c0_7, %c0_8, %c0_9, %c0_10], %8 {strides = array<i32>} : memref<1x6x1x16x128xf32, #tpu.memory_space<vmem>>, vector<1x1x1x16x128xf32>,
    %c0_11 = arith.constant 0 : index
    %c2 = arith.constant 2 : index
    %c0_12 = arith.constant 0 : index
    %c0_13 = arith.constant 0 : index
    %9 = vector.load %arg3[%c0_11, %c2, %c0_12, %c0_13] : memref<1x7x16x128xf32, #tpu.memory_space<vmem>>, vector<1x1x16x128xf32>
    %10 = vector.shape_cast %9 : vector<1x1x16x128xf32> to vector<16x128xf32>
    %c0_14 = arith.constant 0 : index
    %c0_15 = arith.constant 0 : index
    %c0_16 = arith.constant 0 : index
    %c0_17 = arith.constant 0 : index
    %11 = vector.load %arg3[%c0_14, %c0_15, %c0_16, %c0_17] : memref<1x7x16x128xf32, #tpu.memory_space<vmem>>, vector<1x1x16x128xf32>
    %12 = vector.shape_cast %11 : vector<1x1x16x128xf32> to vector<16x128xf32>
    %13 = arith.subf %10, %12 : vector<16x128xf32>
    %14 = math.cos %13 : vector<16x128xf32>
    %c0_18 = arith.constant 0 : index
    %c1_19 = arith.constant 1 : index
    %c0_20 = arith.constant 0 : index
    %c0_21 = arith.constant 0 : index
    %c0_22 = arith.constant 0 : index
    %15 = vector.load %arg4[%c0_18, %c1_19, %c0_20, %c0_21, %c0_22] : memref<1x6x1x16x128xf32, #tpu.memory_space<vmem>>, vector<1x1x1x16x128xf32>
    %16 = vector.shape_cast %15 : vector<1x1x1x16x128xf32> to vector<16x128xf32>
    %17 = vector.shape_cast %14 : vector<16x128xf32> to vector<1x1x1x16x128xf32>
    tpu.vector_store %arg4[%c0_18, %c1_19, %c0_20, %c0_21, %c0_22], %17 {strides = array<i32>} : memref<1x6x1x16x128xf32, #tpu.memory_space<vmem>>, vector<1x1x1x16x128xf32>,
    %c0_23 = arith.constant 0 : index
    %c3 = arith.constant 3 : index
    %c0_24 = arith.constant 0 : index
    %c0_25 = arith.constant 0 : index
    %18 = vector.load %arg3[%c0_23, %c3, %c0_24, %c0_25] : memref<1x7x16x128xf32, #tpu.memory_space<vmem>>, vector<1x1x16x128xf32>
    %19 = vector.shape_cast %18 : vector<1x1x16x128xf32> to vector<16x128xf32>
    %c0_26 = arith.constant 0 : index
    %c0_27 = arith.constant 0 : index
    %c0_28 = arith.constant 0 : index
    %c0_29 = arith.constant 0 : index
    %20 = vector.load %arg3[%c0_26, %c0_27, %c0_28, %c0_29] : memref<1x7x16x128xf32, #tpu.memory_space<vmem>>, vector<1x1x16x128xf32>
    %21 = vector.shape_cast %20 : vector<1x1x16x128xf32> to vector<16x128xf32>
    %22 = arith.subf %19, %21 : vector<16x128xf32>
    %23 = math.cos %22 : vector<16x128xf32>
    %c0_30 = arith.constant 0 : index
    %c2_31 = arith.constant 2 : index
    %c0_32 = arith.constant 0 : index
    %c0_33 = arith.constant 0 : index
    %c0_34 = arith.constant 0 : index
    %24 = vector.load %arg4[%c0_30, %c2_31, %c0_32, %c0_33, %c0_34] : memref<1x6x1x16x128xf32, #tpu.memory_space<vmem>>, vector<1x1x1x16x128xf32>
    %25 = vector.shape_cast %24 : vector<1x1x1x16x128xf32> to vector<16x128xf32>
    %26 = vector.shape_cast %23 : vector<16x128xf32> to vector<1x1x1x16x128xf32>
    tpu.vector_store %arg4[%c0_30, %c2_31, %c0_32, %c0_33, %c0_34], %26 {strides = array<i32>} : memref<1x6x1x16x128xf32, #tpu.memory_space<vmem>>, vector<1x1x1x16x128xf32>,
    %c0_35 = arith.constant 0 : index
    %c4 = arith.constant 4 : index
    %c0_36 = arith.constant 0 : index
    %c0_37 = arith.constant 0 : index
    %27 = vector.load %arg3[%c0_35, %c4, %c0_36, %c0_37] : memref<1x7x16x128xf32, #tpu.memory_space<vmem>>, vector<1x1x16x128xf32>
    %28 = vector.shape_cast %27 : vector<1x1x16x128xf32> to vector<16x128xf32>
    %c0_38 = arith.constant 0 : index
    %c0_39 = arith.constant 0 : index
    %c0_40 = arith.constant 0 : index
    %c0_41 = arith.constant 0 : index
    %29 = vector.load %arg3[%c0_38, %c0_39, %c0_40, %c0_41] : memref<1x7x16x128xf32, #tpu.memory_space<vmem>>, vector<1x1x16x128xf32>
    %30 = vector.shape_cast %29 : vector<1x1x16x128xf32> to vector<16x128xf32>
    %31 = arith.subf %28, %30 : vector<16x128xf32>
    %32 = math.cos %31 : vector<16x128xf32>
    %c0_42 = arith.constant 0 : index
    %c3_43 = arith.constant 3 : index
    %c0_44 = arith.constant 0 : index
    %c0_45 = arith.constant 0 : index
    %c0_46 = arith.constant 0 : index
    %33 = vector.load %arg4[%c0_42, %c3_43, %c0_44, %c0_45, %c0_46] : memref<1x6x1x16x128xf32, #tpu.memory_space<vmem>>, vector<1x1x1x16x128xf32>
    %34 = vector.shape_cast %33 : vector<1x1x1x16x128xf32> to vector<16x128xf32>
    %35 = vector.shape_cast %32 : vector<16x128xf32> to vector<1x1x1x16x128xf32>
    tpu.vector_store %arg4[%c0_42, %c3_43, %c0_44, %c0_45, %c0_46], %35 {strides = array<i32>} : memref<1x6x1x16x128xf32, #tpu.memory_space<vmem>>, vector<1x1x1x16x128xf32>,
    %c0_47 = arith.constant 0 : index
    %c5 = arith.constant 5 : index
    %c0_48 = arith.constant 0 : index
    %c0_49 = arith.constant 0 : index
    %36 = vector.load %arg3[%c0_47, %c5, %c0_48, %c0_49] : memref<1x7x16x128xf32, #tpu.memory_space<vmem>>, vector<1x1x16x128xf32>
    %37 = vector.shape_cast %36 : vector<1x1x16x128xf32> to vector<16x128xf32>
    %c0_50 = arith.constant 0 : index
    %c0_51 = arith.constant 0 : index
    %c0_52 = arith.constant 0 : index
    %c0_53 = arith.constant 0 : index
    %38 = vector.load %arg3[%c0_50, %c0_51, %c0_52, %c0_53] : memref<1x7x16x128xf32, #tpu.memory_space<vmem>>, vector<1x1x16x128xf32>
    %39 = vector.shape_cast %38 : vector<1x1x16x128xf32> to vector<16x128xf32>
    %40 = arith.subf %37, %39 : vector<16x128xf32>
    %41 = math.cos %40 : vector<16x128xf32>
    %c0_54 = arith.constant 0 : index
    %c4_55 = arith.constant 4 : index
    %c0_56 = arith.constant 0 : index
    %c0_57 = arith.constant 0 : index
    %c0_58 = arith.constant 0 : index
    %42 = vector.load %arg4[%c0_54, %c4_55, %c0_56, %c0_57, %c0_58] : memref<1x6x1x16x128xf32, #tpu.memory_space<vmem>>, vector<1x1x1x16x128xf32>
    %43 = vector.shape_cast %42 : vector<1x1x1x16x128xf32> to vector<16x128xf32>
    %44 = vector.shape_cast %41 : vector<16x128xf32> to vector<1x1x1x16x128xf32>
    tpu.vector_store %arg4[%c0_54, %c4_55, %c0_56, %c0_57, %c0_58], %44 {strides = array<i32>} : memref<1x6x1x16x128xf32, #tpu.memory_space<vmem>>, vector<1x1x1x16x128xf32>,
    %c0_59 = arith.constant 0 : index
    %c6 = arith.constant 6 : index
    %c0_60 = arith.constant 0 : index
    %c0_61 = arith.constant 0 : index
    %45 = vector.load %arg3[%c0_59, %c6, %c0_60, %c0_61] : memref<1x7x16x128xf32, #tpu.memory_space<vmem>>, vector<1x1x16x128xf32>
    %46 = vector.shape_cast %45 : vector<1x1x16x128xf32> to vector<16x128xf32>
    %c0_62 = arith.constant 0 : index
    %c0_63 = arith.constant 0 : index
    %c0_64 = arith.constant 0 : index
    %c0_65 = arith.constant 0 : index
    %47 = vector.load %arg3[%c0_62, %c0_63, %c0_64, %c0_65] : memref<1x7x16x128xf32, #tpu.memory_space<vmem>>, vector<1x1x16x128xf32>
    %48 = vector.shape_cast %47 : vector<1x1x16x128xf32> to vector<16x128xf32>
    %49 = arith.subf %46, %48 : vector<16x128xf32>
    %50 = math.cos %49 : vector<16x128xf32>
    %c0_66 = arith.constant 0 : index
    %c5_67 = arith.constant 5 : index
    %c0_68 = arith.constant 0 : index
    %c0_69 = arith.constant 0 : index
    %c0_70 = arith.constant 0 : index
    %51 = vector.load %arg4[%c0_66, %c5_67, %c0_68, %c0_69, %c0_70] : memref<1x6x1x16x128xf32, #tpu.memory_space<vmem>>, vector<1x1x1x16x128xf32>
    %52 = vector.shape_cast %51 : vector<1x1x1x16x128xf32> to vector<16x128xf32>
    %53 = vector.shape_cast %50 : vector<16x128xf32> to vector<1x1x1x16x128xf32>
    tpu.vector_store %arg4[%c0_66, %c5_67, %c0_68, %c0_69, %c0_70], %53 {strides = array<i32>} : memref<1x6x1x16x128xf32, #tpu.memory_space<vmem>>, vector<1x1x1x16x128xf32>,
    return
  }
  func.func @transform_0(%arg0: i32, %arg1: i32, %arg2: i32) -> (i32, i32, i32, i32) {
    %c0_i32 = arith.constant 0 : i32
    %c0_i32_0 = arith.constant 0 : i32
    return %arg0, %c0_i32, %arg1, %arg2 : i32, i32, i32, i32
  }
  func.func @transform_1(%arg0: i32, %arg1: i32, %arg2: i32) -> (i32, i32, i32, i32, i32) {
    %c0_i32 = arith.constant 0 : i32
    %c0_i32_0 = arith.constant 0 : i32
    %c0_i32_1 = arith.constant 0 : i32
    return %arg0, %c0_i32, %c0_i32_0, %arg1, %arg2 : i32, i32, i32, i32, i32
  }
}

</mosaic_0001>

<llo_original>
// kernel: tpu_custom_call.1
$region0: #{tpu_custom_call.1}
  #allocation0 [shape = 'u32[]', space=smem, size = 0x4, offset = 0x4, fixed_abs, tag = 'smem constant byte address 0x4 - core index']
  #allocation1 [shape = 'u32[144,128]{1,0:T(1,128)}', space=vmem, size = 0x12000, scoped, tag = 'internal scratch']
  %s0 = inlined_call_operand.hbm [shape: f32[2,7,16,128], index: 0, kind: input, shape index: {}]
  %s1 = inlined_call_operand.hbm [shape: f32[2,6,1,16,128], index: 1, kind: output, shape index: {}]
  %s2 = sld [smem:[#allocation0]]
  $region41: #{tpu_custom_call.1} parent=0
    _
  %s4 = ssub.s32 1, %s2
  %s5 = scalar_select 0, %s4, %s2
  $region1: #{tpu_custom_call.1} parent=0
    #allocation2 [shape = 'u8[114688]{0}', space=vmem, size = 0x1c000, scoped, tag = 'input window, operand 0']
    #allocation3 [shape = 's32[2]{0}', space=sflag, size = 0x8, scoped, tag = 'scoped memory for tpu_custom_call.1']
    #allocation4 [shape = 's32[2]{0}', space=sflag, size = 0x8, scoped, tag = 'scoped memory for tpu_custom_call.1']
    #allocation5 [shape = 'u8[98304]{0}', space=vmem, size = 0x18000, scoped, tag = 'output window, operand 0']
    %6 = vsyncpa [#allocation3], 0
    %s7 = scalar_lea.sflag [#allocation3], 1
    %8 = vsyncpa %s7, 0
    %9 = vsyncpa [#allocation4], 0
    %s10 = scalar_lea.sflag [#allocation4], 1
    %11 = vsyncpa %s10, 0
    loop: start=0, step=1, limit=4
    $region2: #{tpu_custom_call.1} parent=1 // loop_pre_header
      _
    $region3: #{tpu_custom_call.1} parent=1 // loop_header
      %s13 = sphi 0, %s17
      %p14 = scmp.ge.s32.totalorder %s13, 4
      %s20 = sphi 0, %s39
      %s21 = sphi 0, %s35
      %s22 = sphi 0, %s31
      %s23 = sphi 0, %s20
      %s24 = sphi 0, %s21
      %s25 = sphi 0, %s22
      %s26 = sphi 0, %s23
      %s27 = sphi 0, %s24
      %s28 = sphi 0, %s25
      %s46 = sphi 0, %s48
      %s49 = sphi 0, %s46
      %s50 = sphi 0, %s49
      %s66 = sphi 0, %s50
      %s76 = sphi 0, %s78
      %s79 = sphi 0, %s76
      %s80 = sphi 0, %s79
      %s96 = sphi 0, %s80
    $region4: #{tpu_custom_call.1} parent=1 // loop_header_branch
      %16 = sbr.rel (%p14) target = $region8
    $region5: #{tpu_custom_call.1} parent=1 // loop_body
      %s18 = ssub.s32 %s13, 1
      %s19 = ssub.s32 %s13, 2
      %s29 = sadd.s32 1, %s22
      %p30 = scmp.ge.s32.totalorder %s29, 1
      %s31 = scalar_select %p30, 0, %s29
      %s32 = sadd.s32 1, %s21
      %s33 = scalar_select %p30, %s32, %s21
      %p34 = scmp.ge.s32.totalorder %s33, 1
      %s35 = scalar_select %p34, 0, %s33
      %s36 = sadd.s32 1, %s20
      %s37 = scalar_select %p34, %s36, %s20
      %p38 = scmp.ge.s32.totalorder %s37, 2
      %s39 = scalar_select %p38, 0, %s37
      %s40 = ssub.s32 %s20, %s39
      %s41 = ssub.s32 %s21, %s35
      %s42 = sor.u32 %s40, %s41
      %s43 = ssub.s32 %s22, %s31
      %s44 = sor.u32 %s42, %s43
      %p45 = scmp.eq.s32.totalorder %s44, 0
      %s47 = sadd.s32 %s46, 1
      %s48 = scalar_select %p45, %s46, %s47
      %p51 = pneg %p45
      %p52 = scmp.eq.s32.totalorder %s13, 1
      %p53 = por %p51, %p52
      %p54 = scmp.ne.s32.totalorder %s46, %s49
      %p55 = scmp.eq.s32.totalorder %s13, 0
      %p56 = por %p54, %p55
      %p57 = scmp.ne.s32.totalorder %s46, %s49
      %p58 = scmp.eq.s32.totalorder %s18, 1
      %p59 = por %p57, %p58
      %p60 = scmp.ne.s32.totalorder %s49, %s50
      %p61 = scmp.eq.s32.totalorder %s18, 0
      %p62 = por %p60, %p61
      %p63 = scmp.ne.s32.totalorder %s49, %s50
      %p64 = scmp.eq.s32.totalorder %s19, 1
      %p65 = por %p63, %p64
      %p67 = scmp.ne.s32.totalorder %s50, %s66
      %p68 = scmp.eq.s32.totalorder %s19, 0
      %p69 = por %p67, %p68
      %s70 = ssub.s32 %s20, %s39
      %s71 = ssub.s32 %s21, %s35
      %s72 = sor.u32 %s70, %s71
      %s73 = ssub.s32 %s22, %s31
      %s74 = sor.u32 %s72, %s73
      %p75 = scmp.eq.s32.totalorder %s74, 0
      %s77 = sadd.s32 %s76, 1
      %s78 = scalar_select %p75, %s76, %s77
      %p81 = pneg %p75
      %p82 = scmp.eq.s32.totalorder %s13, 1
      %p83 = por %p81, %p82
      %p84 = scmp.ne.s32.totalorder %s76, %s79
      %p85 = scmp.eq.s32.totalorder %s13, 0
      %p86 = por %p84, %p85
      %p87 = scmp.ne.s32.totalorder %s76, %s79
      %p88 = scmp.eq.s32.totalorder %s18, 1
      %p89 = por %p87, %p88
      %p90 = scmp.ne.s32.totalorder %s79, %s80
      %p91 = scmp.eq.s32.totalorder %s18, 0
      %p92 = por %p90, %p91
      %p93 = scmp.ne.s32.totalorder %s79, %s80
      %p94 = scmp.eq.s32.totalorder %s19, 1
      %p95 = por %p93, %p94
      %p97 = scmp.ne.s32.totalorder %s80, %s96
      %p98 = scmp.eq.s32.totalorder %s19, 0
      %p99 = por %p97, %p98
      %p100 = scmp.le.s32.totalorder 1, %s13
      %p101 = scmp.lt.s32.totalorder %s13, 3
      %p102 = pnand %p100, %p101
      %p103 = pneg %p102
      // Predicated region
      $region9: #{tpu_custom_call.1} parent=5 // pred_check
        _
      $region10: #{tpu_custom_call.1} parent=5 // pred_check_branch
        %105 = sbr.rel (%p102) target = $region12
      $region11: #{tpu_custom_call.1} parent=5 // pred_region
        %s106 = ssub.s32 %s13, 1
      $region12: #{tpu_custom_call.1} parent=5 // pred_fallthru
        _
      %p107 = scmp.lt.s32.totalorder %s13, 2
      // Predicated region
      $region13: #{tpu_custom_call.1} parent=5 // pred_check
        %p108 = pneg %p107
      $region14: #{tpu_custom_call.1} parent=5 // pred_check_branch
        %110 = sbr.rel (%p108) target = $region16
      $region15: #{tpu_custom_call.1} parent=5 // pred_region
        // Predicated region
        $region17: #{tpu_custom_call.1} parent=15 // pred_check
          %p111 = pneg %p56
        $region18: #{tpu_custom_call.1} parent=15 // pred_check_branch
          %113 = sbr.rel (%p111) target = $region20
        $region19: #{tpu_custom_call.1} parent=15 // pred_region
          %s114 = sand.u32 %s46, 1
          %s115 = scalar_lea.sflag [#allocation3], %s114
          %s116 = sand.u32 %s46, 1
          %s117 = smul.addr %s116, 112
          %s118 = scalar_lea.vmem [#allocation2], %s117
          %s119 = smul.u32 2, %s21
          %s121 = ssub.s32 1792, 1792
          %122 = vsyncadd %s115, %s121
          %s123 = sadd.s32 %s22, %s119
          %s124 = smul.addr %s20, 14
          %s125 = sadd.s32 %s123, %s124
          %s126 = smul.addr %s125, 128
          %s127 = scalar_lea.hbm %s0, %s126
          %s128 = sshll.u32 %s118, 4
          %s129 = int_to_ptr.vmem [resolvable:$true] %s128
          %134 = dma.hbm_to_vmem [thread:$0]  %s127, 1792, %s129, %s115, 128, 128, 8
        $region20: #{tpu_custom_call.1} parent=15 // pred_fallthru
          _
      $region16: #{tpu_custom_call.1} parent=5 // pred_fallthru
        _
      %p135 = scmp.le.s32.totalorder 1, %s13
      %p136 = scmp.lt.s32.totalorder %s13, 3
      %p137 = pnand %p135, %p136
      %p138 = pneg %p137
      // Predicated region
      $region21: #{tpu_custom_call.1} parent=5 // pred_check
        _
      $region22: #{tpu_custom_call.1} parent=5 // pred_check_branch
        %140 = sbr.rel (%p137) target = $region24
      $region23: #{tpu_custom_call.1} parent=5 // pred_region
        %s141 = ssub.s32 %s13, 1
        %s142 = sand.u32 %s49, 1
        %s143 = scalar_lea.sflag [#allocation3], %s142
        %s144 = sand.u32 %s49, 1
        %s145 = smul.addr %s144, 112
        %s146 = scalar_lea.vmem [#allocation2], %s145
        // Predicated region
        $region25: #{tpu_custom_call.1} parent=23 // pred_check
          %p147 = pneg %p62
        $region26: #{tpu_custom_call.1} parent=23 // pred_check_branch
          %149 = sbr.rel (%p147) target = $region28
        $region27: #{tpu_custom_call.1} parent=23 // pred_region
          %150 = dma.done %s143, 1792
        $region28: #{tpu_custom_call.1} parent=23 // pred_fallthru
          _
        %s151 = sand.u32 %s49, 1
        %s152 = scalar_lea.sflag [#allocation3], %s151
        %s153 = sand.u32 %s49, 1
        %s154 = smul.addr %s153, 112
        %s155 = scalar_lea.vmem [#allocation2], %s154
        %p156 = pneg %p62
        %p157 = pneg %p59
        %p158 = pneg %p92
        %p159 = pneg %p89
        %s160 = sand.u32 %s79, 1
        %s161 = scalar_lea.sflag [#allocation4], %s160
        %s162 = sand.u32 %s79, 1
        %s163 = smul.addr %s162, 96
        %s164 = scalar_lea.vmem [#allocation5], %s163
        %s165 = smul.u32 2, %s24
        %s166 = smul.u32 2, %s24
        %s167 = scalar_lea.vmem %s146, 16 [#allocation2]
        %v168 = vld [vmem:[%s167] sm:$0xff]
        %v169 = vld [vmem:[%s167 + $0x8] sm:$0xff]
        %v170 = vld [vmem:[%s146] sm:$0xff]
        %v171 = vld [vmem:[%s146 + $0x8] sm:$0xff]
        %v172 = vsub.f32 %v168, %v170
        %v173 = vsub.f32 %v169, %v171
        %v174 = vand.u32 2147483647, %v172
        %vm175 = vcmp.le.f32.partialorder %v174, 0.7853982
        %vm176 = vcmp.lt.s32.totalorder %v172, 0
        %v177 = vand.u32 %v172, 2139095040
        %v178 = vshrl.u32 %v177, 23
        %v179 = vsub.s32 %v178, 127
        %v180 = vand.u32 2147483647, %v172
        %v181 = vand.u32 %v180, 8388607
        %v182 = vor.u32 %v181, 8388608
        %v183 = vsub.s32 0, %v182
        %v184 = vadd.s32 %v179, 1
        %vm185 = vcmp.gt.s32.totalorder %v184, 0
        %v186 = vsel %vm185, %v184, 0
        %v187 = vshrl.u32 %v186, 5
        %v188 = vand.u32 %v186, 31
        %v189 = vsub.s32 32, %v188
        %v190 = vshrl.u32 683565275, %v189
        %v191 = vshll.u32 683565275, %v188
        %v192 = vshrl.u32 2475754826, %v189
        %v193 = vor.u32 %v191, %v192
        %v194 = vshll.u32 2475754826, %v188
        %v195 = vshrl.u32 2131351028, %v189
        %v196 = vor.u32 %v194, %v195
        %v197 = vshll.u32 2131351028, %v188
        %v198 = vshrl.u32 2102212464, %v189
        %v199 = vor.u32 %v197, %v198
        %v200 = vshll.u32 2102212464, %v188
        %v201 = vshrl.u32 920167782, %v189
        %v202 = vor.u32 %v200, %v201
        %v203 = vshll.u32 920167782, %v188
        %v204 = vshrl.u32 1326507024, %v189
        %v205 = vor.u32 %v203, %v204
        %vm206 = vcmp.lt.s32.totalorder %v187, 1
        %vm207 = vcmp.lt.s32.totalorder %v187, 2
        %vm208 = vcmp.lt.s32.totalorder %v187, 3
        %vm209 = vcmp.lt.s32.totalorder %v187, 4
        %v210 = vsel %vm206, %v190, %v193
        %v211 = vsel %vm209, %v199, 2102212464
        %v212 = vsel %vm208, %v196, %v211
        %v213 = vsel %vm207, %v210, %v212
        %v214 = vsel %vm206, %v193, %v196
        %v215 = vsel %vm209, %v202, 920167782
        %v216 = vsel %vm208, %v199, %v215
        %v217 = vsel %vm207, %v214, %v216
        %v218 = vsel %vm206, %v196, %v199
        %v219 = vsel %vm209, %v205, 1326507024
        %v220 = vsel %vm208, %v202, %v219
        %v221 = vsel %vm207, %v218, %v220
        %v222 = vshll.u32 %v182, 8
        %v223 = vmul.u32.u64.compose %v222, %v221
        %v224 = vextract.low.u32 %v223
        %v225 = vextract.high.u32 %v223
        %v226 = vmul.u32.u64.compose %v222, %v217
        %v227 = vextract.low.u32 %v226
        %v228 = vextract.high.u32 %v226
        %v229 = vmul.u32 %v222, %v213
        %v230 = vadd.s32 %v225, %v227
        %vm231 = vc.u32 %v225, %v227
        %v232 = vadd.s32 %v228, 1
        %v233 = vsel %vm231, %v232, %v228
        %v234 = vadd.s32 %v229, %v233
        %v235 = vadd.s32 %v234, 536870912
        %v236 = vshrl.u32 %v235, 30
        %v237 = vshll.u32 %v236, 30
        %v238 = vsub.s32 %v234, %v237
        %vm239 = vcmp.lt.s32.totalorder %v238, 0
        %v240 = vsub.s32 0, %v238
        %v241 = vsel %vm239, %v240, %v238
        %v242 = vclz %v241
        %v243 = vsub.s32 %v242, 2
        %vm244 = vcmp.gt.s32.totalorder 0, %v243
        %v245 = vsel %vm244, 0, %v243
        %v246 = vsub.s32 32, %v245
        %v247 = vshll.u32 %v238, %v245
        %v248 = vshrl.u32 %v230, %v246
        %v249 = vor.u32 %v247, %v248
        %v250 = vsub.s32 4294967266, %v245
        %v251 = vadd.s32 %v250, 127
        %v252 = vshll.u32 %v251, 23
        %v253 = vor.u32 4788187, %v252
        %v254 = vand.u32 2147483647, %v253
        %v256 = vcvt.s32.f32 %v249
        %v257 = vmul.f32 %v256, %v254
        %v258 = vxor.u32 %v257, 2147483648
        %v259 = vsel %vm176, %v258, %v257
        %v260 = vsub.s32 4, %v236
        %v261 = vsel %vm176, %v260, %v236
        %v262 = vsel %vm175, %v172, %v259
        %v263 = vsel %vm175, 0, %v261
        %v264 = vcosq.f32.pop %v262
        %v265 = vsinq.f32.pop %v262
        %vm266 = vweird.f32 %v172
        %v267 = vand.u32 %v263, 3
        %vm268 = vcmp.lt.s32.totalorder %v267, 2
        %vm269 = vcmp.eq.s32.totalorder %v267, 0
        %v270 = vxor.u32 %v265, 2147483648
        %v271 = vsel %vm269, %v264, %v270
        %vm272 = vcmp.eq.s32.totalorder %v267, 2
        %v273 = vxor.u32 %v264, 2147483648
        %v274 = vsel %vm272, %v273, %v265
        %v275 = vsel %vm268, %v271, %v274
        %v276 = vsel %vm266, nan, %v275
        %v277 = vand.u32 2147483647, %v173
        %vm278 = vcmp.le.f32.partialorder %v277, 0.7853982
        %vm279 = vcmp.lt.s32.totalorder %v173, 0
        %v280 = vand.u32 %v173, 2139095040
        %v281 = vshrl.u32 %v280, 23
        %v282 = vsub.s32 %v281, 127
        %v283 = vand.u32 2147483647, %v173
        %v284 = vand.u32 %v283, 8388607
        %v285 = vor.u32 %v284, 8388608
        %v286 = vsub.s32 0, %v285
        %v287 = vadd.s32 %v282, 1
        %vm288 = vcmp.gt.s32.totalorder %v287, 0
        %v289 = vsel %vm288, %v287, 0
        %v290 = vshrl.u32 %v289, 5
        %v291 = vand.u32 %v289, 31
        %v292 = vsub.s32 32, %v291
        %v293 = vshrl.u32 683565275, %v292
        %v294 = vshll.u32 683565275, %v291
        %v295 = vshrl.u32 2475754826, %v292
        %v296 = vor.u32 %v294, %v295
        %v297 = vshll.u32 2475754826, %v291
        %v298 = vshrl.u32 2131351028, %v292
        %v299 = vor.u32 %v297, %v298
        %v300 = vshll.u32 2131351028, %v291
        %v301 = vshrl.u32 2102212464, %v292
        %v302 = vor.u32 %v300, %v301
        %v303 = vshll.u32 2102212464, %v291
        %v304 = vshrl.u32 920167782, %v292
        %v305 = vor.u32 %v303, %v304
        %v306 = vshll.u32 920167782, %v291
        %v307 = vshrl.u32 1326507024, %v292
        %v308 = vor.u32 %v306, %v307
        %vm309 = vcmp.lt.s32.totalorder %v290, 1
        %vm310 = vcmp.lt.s32.totalorder %v290, 2
        %vm311 = vcmp.lt.s32.totalorder %v290, 3
        %vm312 = vcmp.lt.s32.totalorder %v290, 4
        %v313 = vsel %vm309, %v293, %v296
        %v314 = vsel %vm312, %v302, 2102212464
        %v315 = vsel %vm311, %v299, %v314
        %v316 = vsel %vm310, %v313, %v315
        %v317 = vsel %vm309, %v296, %v299
        %v318 = vsel %vm312, %v305, 920167782
        %v319 = vsel %vm311, %v302, %v318
        %v320 = vsel %vm310, %v317, %v319
        %v321 = vsel %vm309, %v299, %v302
        %v322 = vsel %vm312, %v308, 1326507024
        %v323 = vsel %vm311, %v305, %v322
        %v324 = vsel %vm310, %v321, %v323
        %v325 = vshll.u32 %v285, 8
        %v326 = vmul.u32.u64.compose %v325, %v324
        %v327 = vextract.low.u32 %v326
        %v328 = vextract.high.u32 %v326
        %v329 = vmul.u32.u64.compose %v325, %v320
        %v330 = vextract.low.u32 %v329
        %v331 = vextract.high.u32 %v329
        %v332 = vmul.u32 %v325, %v316
        %v333 = vadd.s32 %v328, %v330
        %vm334 = vc.u32 %v328, %v330
        %v335 = vadd.s32 %v331, 1
        %v336 = vsel %vm334, %v335, %v331
        %v337 = vadd.s32 %v332, %v336
        %v338 = vadd.s32 %v337, 536870912
        %v339 = vshrl.u32 %v338, 30
        %v340 = vshll.u32 %v339, 30
        %v341 = vsub.s32 %v337, %v340
        %vm342 = vcmp.lt.s32.totalorder %v341, 0
        %v343 = vsub.s32 0, %v341
        %v344 = vsel %vm342, %v343, %v341
        %v345 = vclz %v344
        %v346 = vsub.s32 %v345, 2
        %vm347 = vcmp.gt.s32.totalorder 0, %v346
        %v348 = vsel %vm347, 0, %v346
        %v349 = vsub.s32 32, %v348
        %v350 = vshll.u32 %v341, %v348
        %v351 = vshrl.u32 %v333, %v349
        %v352 = vor.u32 %v350, %v351
        %v353 = vsub.s32 4294967266, %v348
        %v354 = vadd.s32 %v353, 127
        %v355 = vshll.u32 %v354, 23
        %v356 = vor.u32 4788187, %v355
        %v357 = vand.u32 2147483647, %v356
        %v359 = vcvt.s32.f32 %v352
        %v360 = vmul.f32 %v359, %v357
        %v361 = vxor.u32 %v360, 2147483648
        %v362 = vsel %vm279, %v361, %v360
        %v363 = vsub.s32 4, %v339
        %v364 = vsel %vm279, %v363, %v339
        %v365 = vsel %vm278, %v173, %v362
        %v366 = vsel %vm278, 0, %v364
        %v367 = vcosq.f32.pop %v365
        %v368 = vsinq.f32.pop %v365
        %vm369 = vweird.f32 %v173
        %v370 = vand.u32 %v366, 3
        %vm371 = vcmp.lt.s32.totalorder %v370, 2
        %vm372 = vcmp.eq.s32.totalorder %v370, 0
        %v373 = vxor.u32 %v368, 2147483648
        %v374 = vsel %vm372, %v367, %v373
        %vm375 = vcmp.eq.s32.totalorder %v370, 2
        %v376 = vxor.u32 %v367, 2147483648
        %v377 = vsel %vm375, %v376, %v368
        %v378 = vsel %vm371, %v374, %v377
        %v379 = vsel %vm369, nan, %v378
        %380 = vst [vmem:[%s164] sm:$0xff] %v276
        %381 = vst [vmem:[%s164 + $0x8] sm:$0xff] %v379
        %s382 = scalar_lea.vmem %s146, 32 [#allocation2]
        %v383 = vld [vmem:[%s382] sm:$0xff]
        %v384 = vld [vmem:[%s382 + $0x8] sm:$0xff]
        %v385 = vld [vmem:[%s146] sm:$0xff]
        %v386 = vld [vmem:[%s146 + $0x8] sm:$0xff]
        %v387 = vsub.f32 %v383, %v385
        %v388 = vsub.f32 %v384, %v386
        %v389 = vand.u32 2147483647, %v387
        %vm390 = vcmp.le.f32.partialorder %v389, 0.7853982
        %vm391 = vcmp.lt.s32.totalorder %v387, 0
        %v392 = vand.u32 %v387, 2139095040
        %v393 = vshrl.u32 %v392, 23
        %v394 = vsub.s32 %v393, 127
        %v395 = vand.u32 2147483647, %v387
        %v396 = vand.u32 %v395, 8388607
        %v397 = vor.u32 %v396, 8388608
        %v398 = vsub.s32 0, %v397
        %v399 = vadd.s32 %v394, 1
        %vm400 = vcmp.gt.s32.totalorder %v399, 0
        %v401 = vsel %vm400, %v399, 0
        %v402 = vshrl.u32 %v401, 5
        %v403 = vand.u32 %v401, 31
        %v404 = vsub.s32 32, %v403
        %v405 = vshrl.u32 683565275, %v404
        %v406 = vshll.u32 683565275, %v403
        %v407 = vshrl.u32 2475754826, %v404
        %v408 = vor.u32 %v406, %v407
        %v409 = vshll.u32 2475754826, %v403
        %v410 = vshrl.u32 2131351028, %v404
        %v411 = vor.u32 %v409, %v410
        %v412 = vshll.u32 2131351028, %v403
        %v413 = vshrl.u32 2102212464, %v404
        %v414 = vor.u32 %v412, %v413
        %v415 = vshll.u32 2102212464, %v403
        %v416 = vshrl.u32 920167782, %v404
        %v417 = vor.u32 %v415, %v416
        %v418 = vshll.u32 920167782, %v403
        %v419 = vshrl.u32 1326507024, %v404
        %v420 = vor.u32 %v418, %v419
        %vm421 = vcmp.lt.s32.totalorder %v402, 1
        %vm422 = vcmp.lt.s32.totalorder %v402, 2
        %vm423 = vcmp.lt.s32.totalorder %v402, 3
        %vm424 = vcmp.lt.s32.totalorder %v402, 4
        %v425 = vsel %vm421, %v405, %v408
        %v426 = vsel %vm424, %v414, 2102212464
        %v427 = vsel %vm423, %v411, %v426
        %v428 = vsel %vm422, %v425, %v427
        %v429 = vsel %vm421, %v408, %v411
        %v430 = vsel %vm424, %v417, 920167782
        %v431 = vsel %vm423, %v414, %v430
        %v432 = vsel %vm422, %v429, %v431
        %v433 = vsel %vm421, %v411, %v414
        %v434 = vsel %vm424, %v420, 1326507024
        %v435 = vsel %vm423, %v417, %v434
        %v436 = vsel %vm422, %v433, %v435
        %v437 = vshll.u32 %v397, 8
        %v438 = vmul.u32.u64.compose %v437, %v436
        %v439 = vextract.low.u32 %v438
        %v440 = vextract.high.u32 %v438
        %v441 = vmul.u32.u64.compose %v437, %v432
        %v442 = vextract.low.u32 %v441
        %v443 = vextract.high.u32 %v441
        %v444 = vmul.u32 %v437, %v428
        %v445 = vadd.s32 %v440, %v442
        %vm446 = vc.u32 %v440, %v442
        %v447 = vadd.s32 %v443, 1
        %v448 = vsel %vm446, %v447, %v443
        %v449 = vadd.s32 %v444, %v448
        %v450 = vadd.s32 %v449, 536870912
        %v451 = vshrl.u32 %v450, 30
        %v452 = vshll.u32 %v451, 30
        %v453 = vsub.s32 %v449, %v452
        %vm454 = vcmp.lt.s32.totalorder %v453, 0
        %v455 = vsub.s32 0, %v453
        %v456 = vsel %vm454, %v455, %v453
        %v457 = vclz %v456
        %v458 = vsub.s32 %v457, 2
        %vm459 = vcmp.gt.s32.totalorder 0, %v458
        %v460 = vsel %vm459, 0, %v458
        %v461 = vsub.s32 32, %v460
        %v462 = vshll.u32 %v453, %v460
        %v463 = vshrl.u32 %v445, %v461
        %v464 = vor.u32 %v462, %v463
        %v465 = vsub.s32 4294967266, %v460
        %v466 = vadd.s32 %v465, 127
        %v467 = vshll.u32 %v466, 23
        %v468 = vor.u32 4788187, %v467
        %v469 = vand.u32 2147483647, %v468
        %v471 = vcvt.s32.f32 %v464
        %v472 = vmul.f32 %v471, %v469
        %v473 = vxor.u32 %v472, 2147483648
        %v474 = vsel %vm391, %v473, %v472
        %v475 = vsub.s32 4, %v451
        %v476 = vsel %vm391, %v475, %v451
        %v477 = vsel %vm390, %v387, %v474
        %v478 = vsel %vm390, 0, %v476
        %v479 = vcosq.f32.pop %v477
        %v480 = vsinq.f32.pop %v477
        %vm481 = vweird.f32 %v387
        %v482 = vand.u32 %v478, 3
        %vm483 = vcmp.lt.s32.totalorder %v482, 2
        %vm484 = vcmp.eq.s32.totalorder %v482, 0
        %v485 = vxor.u32 %v480, 2147483648
        %v486 = vsel %vm484, %v479, %v485
        %vm487 = vcmp.eq.s32.totalorder %v482, 2
        %v488 = vxor.u32 %v479, 2147483648
        %v489 = vsel %vm487, %v488, %v480
        %v490 = vsel %vm483, %v486, %v489
        %v491 = vsel %vm481, nan, %v490
        %v492 = vand.u32 2147483647, %v388
        %vm493 = vcmp.le.f32.partialorder %v492, 0.7853982
        %vm494 = vcmp.lt.s32.totalorder %v388, 0
        %v495 = vand.u32 %v388, 2139095040
        %v496 = vshrl.u32 %v495, 23
        %v497 = vsub.s32 %v496, 127
        %v498 = vand.u32 2147483647, %v388
        %v499 = vand.u32 %v498, 8388607
        %v500 = vor.u32 %v499, 8388608
        %v501 = vsub.s32 0, %v500
        %v502 = vadd.s32 %v497, 1
        %vm503 = vcmp.gt.s32.totalorder %v502, 0
        %v504 = vsel %vm503, %v502, 0
        %v505 = vshrl.u32 %v504, 5
        %v506 = vand.u32 %v504, 31
        %v507 = vsub.s32 32, %v506
        %v508 = vshrl.u32 683565275, %v507
        %v509 = vshll.u32 683565275, %v506
        %v510 = vshrl.u32 2475754826, %v507
        %v511 = vor.u32 %v509, %v510
        %v512 = vshll.u32 2475754826, %v506
        %v513 = vshrl.u32 2131351028, %v507
        %v514 = vor.u32 %v512, %v513
        %v515 = vshll.u32 2131351028, %v506
        %v516 = vshrl.u32 2102212464, %v507
        %v517 = vor.u32 %v515, %v516
        %v518 = vshll.u32 2102212464, %v506
        %v519 = vshrl.u32 920167782, %v507
        %v520 = vor.u32 %v518, %v519
        %v521 = vshll.u32 920167782, %v506
        %v522 = vshrl.u32 1326507024, %v507
        %v523 = vor.u32 %v521, %v522
        %vm524 = vcmp.lt.s32.totalorder %v505, 1
        %vm525 = vcmp.lt.s32.totalorder %v505, 2
        %vm526 = vcmp.lt.s32.totalorder %v505, 3
        %vm527 = vcmp.lt.s32.totalorder %v505, 4
        %v528 = vsel %vm524, %v508, %v511
        %v529 = vsel %vm527, %v517, 2102212464
        %v530 = vsel %vm526, %v514, %v529
        %v531 = vsel %vm525, %v528, %v530
        %v532 = vsel %vm524, %v511, %v514
        %v533 = vsel %vm527, %v520, 920167782
        %v534 = vsel %vm526, %v517, %v533
        %v535 = vsel %vm525, %v532, %v534
        %v536 = vsel %vm524, %v514, %v517
        %v537 = vsel %vm527, %v523, 1326507024
        %v538 = vsel %vm526, %v520, %v537
        %v539 = vsel %vm525, %v536, %v538
        %v540 = vshll.u32 %v500, 8
        %v541 = vmul.u32.u64.compose %v540, %v539
        %v542 = vextract.low.u32 %v541
        %v543 = vextract.high.u32 %v541
        %v544 = vmul.u32.u64.compose %v540, %v535
        %v545 = vextract.low.u32 %v544
        %v546 = vextract.high.u32 %v544
        %v547 = vmul.u32 %v540, %v531
        %v548 = vadd.s32 %v543, %v545
        %vm549 = vc.u32 %v543, %v545
        %v550 = vadd.s32 %v546, 1
        %v551 = vsel %vm549, %v550, %v546
        %v552 = vadd.s32 %v547, %v551
        %v553 = vadd.s32 %v552, 536870912
        %v554 = vshrl.u32 %v553, 30
        %v555 = vshll.u32 %v554, 30
        %v556 = vsub.s32 %v552, %v555
        %vm557 = vcmp.lt.s32.totalorder %v556, 0
        %v558 = vsub.s32 0, %v556
        %v559 = vsel %vm557, %v558, %v556
        %v560 = vclz %v559
        %v561 = vsub.s32 %v560, 2
        %vm562 = vcmp.gt.s32.totalorder 0, %v561
        %v563 = vsel %vm562, 0, %v561
        %v564 = vsub.s32 32, %v563
        %v565 = vshll.u32 %v556, %v563
        %v566 = vshrl.u32 %v548, %v564
        %v567 = vor.u32 %v565, %v566
        %v568 = vsub.s32 4294967266, %v563
        %v569 = vadd.s32 %v568, 127
        %v570 = vshll.u32 %v569, 23
        %v571 = vor.u32 4788187, %v570
        %v572 = vand.u32 2147483647, %v571
        %v574 = vcvt.s32.f32 %v567
        %v575 = vmul.f32 %v574, %v572
        %v576 = vxor.u32 %v575, 2147483648
        %v577 = vsel %vm494, %v576, %v575
        %v578 = vsub.s32 4, %v554
        %v579 = vsel %vm494, %v578, %v554
        %v580 = vsel %vm493, %v388, %v577
        %v581 = vsel %vm493, 0, %v579
        %v582 = vcosq.f32.pop %v580
        %v583 = vsinq.f32.pop %v580
        %vm584 = vweird.f32 %v388
        %v585 = vand.u32 %v581, 3
        %vm586 = vcmp.lt.s32.totalorder %v585, 2
        %vm587 = vcmp.eq.s32.totalorder %v585, 0
        %v588 = vxor.u32 %v583, 2147483648
        %v589 = vsel %vm587, %v582, %v588
        %vm590 = vcmp.eq.s32.totalorder %v585, 2
        %v591 = vxor.u32 %v582, 2147483648
        %v592 = vsel %vm590, %v591, %v583
        %v593 = vsel %vm586, %v589, %v592
        %v594 = vsel %vm584, nan, %v593
        %s595 = scalar_lea.vmem %s164, 16 [#allocation5]
        %596 = vst [vmem:[%s595] sm:$0xff] %v491
        %597 = vst [vmem:[%s595 + $0x8] sm:$0xff] %v594
        %s598 = scalar_lea.vmem %s146, 48 [#allocation2]
        %v599 = vld [vmem:[%s598] sm:$0xff]
        %v600 = vld [vmem:[%s598 + $0x8] sm:$0xff]
        %v601 = vld [vmem:[%s146] sm:$0xff]
        %v602 = vld [vmem:[%s146 + $0x8] sm:$0xff]
        %v603 = vsub.f32 %v599, %v601
        %v604 = vsub.f32 %v600, %v602
        %v605 = vand.u32 2147483647, %v603
        %vm606 = vcmp.le.f32.partialorder %v605, 0.7853982
        %vm607 = vcmp.lt.s32.totalorder %v603, 0
        %v608 = vand.u32 %v603, 2139095040
        %v609 = vshrl.u32 %v608, 23
        %v610 = vsub.s32 %v609, 127
        %v611 = vand.u32 2147483647, %v603
        %v612 = vand.u32 %v611, 8388607
        %v613 = vor.u32 %v612, 8388608
        %v614 = vsub.s32 0, %v613
        %v615 = vadd.s32 %v610, 1
        %vm616 = vcmp.gt.s32.totalorder %v615, 0
        %v617 = vsel %vm616, %v615, 0
        %v618 = vshrl.u32 %v617, 5
        %v619 = vand.u32 %v617, 31
        %v620 = vsub.s32 32, %v619
        %v621 = vshrl.u32 683565275, %v620
        %v622 = vshll.u32 683565275, %v619
        %v623 = vshrl.u32 2475754826, %v620
        %v624 = vor.u32 %v622, %v623
        %v625 = vshll.u32 2475754826, %v619
        %v626 = vshrl.u32 2131351028, %v620
        %v627 = vor.u32 %v625, %v626
        %v628 = vshll.u32 2131351028, %v619
        %v629 = vshrl.u32 2102212464, %v620
        %v630 = vor.u32 %v628, %v629
        %v631 = vshll.u32 2102212464, %v619
        %v632 = vshrl.u32 920167782, %v620
        %v633 = vor.u32 %v631, %v632
        %v634 = vshll.u32 920167782, %v619
        %v635 = vshrl.u32 1326507024, %v620
        %v636 = vor.u32 %v634, %v635
        %vm637 = vcmp.lt.s32.totalorder %v618, 1
        %vm638 = vcmp.lt.s32.totalorder %v618, 2
        %vm639 = vcmp.lt.s32.totalorder %v618, 3
        %vm640 = vcmp.lt.s32.totalorder %v618, 4
        %v641 = vsel %vm637, %v621, %v624
        %v642 = vsel %vm640, %v630, 2102212464
        %v643 = vsel %vm639, %v627, %v642
        %v644 = vsel %vm638, %v641, %v643
        %v645 = vsel %vm637, %v624, %v627
        %v646 = vsel %vm640, %v633, 920167782
        %v647 = vsel %vm639, %v630, %v646
        %v648 = vsel %vm638, %v645, %v647
        %v649 = vsel %vm637, %v627, %v630
        %v650 = vsel %vm640, %v636, 1326507024
        %v651 = vsel %vm639, %v633, %v650
        %v652 = vsel %vm638, %v649, %v651
        %v653 = vshll.u32 %v613, 8
        %v654 = vmul.u32.u64.compose %v653, %v652
        %v655 = vextract.low.u32 %v654
        %v656 = vextract.high.u32 %v654
        %v657 = vmul.u32.u64.compose %v653, %v648
        %v658 = vextract.low.u32 %v657
        %v659 = vextract.high.u32 %v657
        %v660 = vmul.u32 %v653, %v644
        %v661 = vadd.s32 %v656, %v658
        %vm662 = vc.u32 %v656, %v658
        %v663 = vadd.s32 %v659, 1
        %v664 = vsel %vm662, %v663, %v659
        %v665 = vadd.s32 %v660, %v664
        %v666 = vadd.s32 %v665, 536870912
        %v667 = vshrl.u32 %v666, 30
        %v668 = vshll.u32 %v667, 30
        %v669 = vsub.s32 %v665, %v668
        %vm670 = vcmp.lt.s32.totalorder %v669, 0
        %v671 = vsub.s32 0, %v669
        %v672 = vsel %vm670, %v671, %v669
        %v673 = vclz %v672
        %v674 = vsub.s32 %v673, 2
        %vm675 = vcmp.gt.s32.totalorder 0, %v674
        %v676 = vsel %vm675, 0, %v674
        %v677 = vsub.s32 32, %v676
        %v678 = vshll.u32 %v669, %v676
        %v679 = vshrl.u32 %v661, %v677
        %v680 = vor.u32 %v678, %v679
        %v681 = vsub.s32 4294967266, %v676
        %v682 = vadd.s32 %v681, 127
        %v683 = vshll.u32 %v682, 23
        %v684 = vor.u32 4788187, %v683
        %v685 = vand.u32 2147483647, %v684
        %v687 = vcvt.s32.f32 %v680
        %v688 = vmul.f32 %v687, %v685
        %v689 = vxor.u32 %v688, 2147483648
        %v690 = vsel %vm607, %v689, %v688
        %v691 = vsub.s32 4, %v667
        %v692 = vsel %vm607, %v691, %v667
        %v693 = vsel %vm606, %v603, %v690
        %v694 = vsel %vm606, 0, %v692
        %v695 = vcosq.f32.pop %v693
        %v696 = vsinq.f32.pop %v693
        %vm697 = vweird.f32 %v603
        %v698 = vand.u32 %v694, 3
        %vm699 = vcmp.lt.s32.totalorder %v698, 2
        %vm700 = vcmp.eq.s32.totalorder %v698, 0
        %v701 = vxor.u32 %v696, 2147483648
        %v702 = vsel %vm700, %v695, %v701
        %vm703 = vcmp.eq.s32.totalorder %v698, 2
        %v704 = vxor.u32 %v695, 2147483648
        %v705 = vsel %vm703, %v704, %v696
        %v706 = vsel %vm699, %v702, %v705
        %v707 = vsel %vm697, nan, %v706
        %v708 = vand.u32 2147483647, %v604
        %vm709 = vcmp.le.f32.partialorder %v708, 0.7853982
        %vm710 = vcmp.lt.s32.totalorder %v604, 0
        %v711 = vand.u32 %v604, 2139095040
        %v712 = vshrl.u32 %v711, 23
        %v713 = vsub.s32 %v712, 127
        %v714 = vand.u32 2147483647, %v604
        %v715 = vand.u32 %v714, 8388607
        %v716 = vor.u32 %v715, 8388608
        %v717 = vsub.s32 0, %v716
        %v718 = vadd.s32 %v713, 1
        %vm719 = vcmp.gt.s32.totalorder %v718, 0
        %v720 = vsel %vm719, %v718, 0
        %v721 = vshrl.u32 %v720, 5
        %v722 = vand.u32 %v720, 31
        %v723 = vsub.s32 32, %v722
        %v724 = vshrl.u32 683565275, %v723
        %v725 = vshll.u32 683565275, %v722
        %v726 = vshrl.u32 2475754826, %v723
        %v727 = vor.u32 %v725, %v726
        %v728 = vshll.u32 2475754826, %v722
        %v729 = vshrl.u32 2131351028, %v723
        %v730 = vor.u32 %v728, %v729
        %v731 = vshll.u32 2131351028, %v722
        %v732 = vshrl.u32 2102212464, %v723
        %v733 = vor.u32 %v731, %v732
        %v734 = vshll.u32 2102212464, %v722
        %v735 = vshrl.u32 920167782, %v723
        %v736 = vor.u32 %v734, %v735
        %v737 = vshll.u32 920167782, %v722
        %v738 = vshrl.u32 1326507024, %v723
        %v739 = vor.u32 %v737, %v738
        %vm740 = vcmp.lt.s32.totalorder %v721, 1
        %vm741 = vcmp.lt.s32.totalorder %v721, 2
        %vm742 = vcmp.lt.s32.totalorder %v721, 3
        %vm743 = vcmp.lt.s32.totalorder %v721, 4
        %v744 = vsel %vm740, %v724, %v727
        %v745 = vsel %vm743, %v733, 2102212464
        %v746 = vsel %vm742, %v730, %v745
        %v747 = vsel %vm741, %v744, %v746
        %v748 = vsel %vm740, %v727, %v730
        %v749 = vsel %vm743, %v736, 920167782
        %v750 = vsel %vm742, %v733, %v749
        %v751 = vsel %vm741, %v748, %v750
        %v752 = vsel %vm740, %v730, %v733
        %v753 = vsel %vm743, %v739, 1326507024
        %v754 = vsel %vm742, %v736, %v753
        %v755 = vsel %vm741, %v752, %v754
        %v756 = vshll.u32 %v716, 8
        %v757 = vmul.u32.u64.compose %v756, %v755
        %v758 = vextract.low.u32 %v757
        %v759 = vextract.high.u32 %v757
        %v760 = vmul.u32.u64.compose %v756, %v751
        %v761 = vextract.low.u32 %v760
        %v762 = vextract.high.u32 %v760
        %v763 = vmul.u32 %v756, %v747
        %v764 = vadd.s32 %v759, %v761
        %vm765 = vc.u32 %v759, %v761
        %v766 = vadd.s32 %v762, 1
        %v767 = vsel %vm765, %v766, %v762
        %v768 = vadd.s32 %v763, %v767
        %v769 = vadd.s32 %v768, 536870912
        %v770 = vshrl.u32 %v769, 30
        %v771 = vshll.u32 %v770, 30
        %v772 = vsub.s32 %v768, %v771
        %vm773 = vcmp.lt.s32.totalorder %v772, 0
        %v774 = vsub.s32 0, %v772
        %v775 = vsel %vm773, %v774, %v772
        %v776 = vclz %v775
        %v777 = vsub.s32 %v776, 2
        %vm778 = vcmp.gt.s32.totalorder 0, %v777
        %v779 = vsel %vm778, 0, %v777
        %v780 = vsub.s32 32, %v779
        %v781 = vshll.u32 %v772, %v779
        %v782 = vshrl.u32 %v764, %v780
        %v783 = vor.u32 %v781, %v782
        %v784 = vsub.s32 4294967266, %v779
        %v785 = vadd.s32 %v784, 127
        %v786 = vshll.u32 %v785, 23
        %v787 = vor.u32 4788187, %v786
        %v788 = vand.u32 2147483647, %v787
        %v790 = vcvt.s32.f32 %v783
        %v791 = vmul.f32 %v790, %v788
        %v792 = vxor.u32 %v791, 2147483648
        %v793 = vsel %vm710, %v792, %v791
        %v794 = vsub.s32 4, %v770
        %v795 = vsel %vm710, %v794, %v770
        %v796 = vsel %vm709, %v604, %v793
        %v797 = vsel %vm709, 0, %v795
        %v798 = vcosq.f32.pop %v796
        %v799 = vsinq.f32.pop %v796
        %vm800 = vweird.f32 %v604
        %v801 = vand.u32 %v797, 3
        %vm802 = vcmp.lt.s32.totalorder %v801, 2
        %vm803 = vcmp.eq.s32.totalorder %v801, 0
        %v804 = vxor.u32 %v799, 2147483648
        %v805 = vsel %vm803, %v798, %v804
        %vm806 = vcmp.eq.s32.totalorder %v801, 2
        %v807 = vxor.u32 %v798, 2147483648
        %v808 = vsel %vm806, %v807, %v799
        %v809 = vsel %vm802, %v805, %v808
        %v810 = vsel %vm800, nan, %v809
        %s811 = scalar_lea.vmem %s164, 32 [#allocation5]
        %812 = vst [vmem:[%s811] sm:$0xff] %v707
        %813 = vst [vmem:[%s811 + $0x8] sm:$0xff] %v810
        %s814 = scalar_lea.vmem %s146, 64 [#allocation2]
        %v815 = vld [vmem:[%s814] sm:$0xff]
        %v816 = vld [vmem:[%s814 + $0x8] sm:$0xff]
        %v817 = vld [vmem:[%s146] sm:$0xff]
        %v818 = vld [vmem:[%s146 + $0x8] sm:$0xff]
        %v819 = vsub.f32 %v815, %v817
        %v820 = vsub.f32 %v816, %v818
        %v821 = vand.u32 2147483647, %v819
        %vm822 = vcmp.le.f32.partialorder %v821, 0.7853982
        %vm823 = vcmp.lt.s32.totalorder %v819, 0
        %v824 = vand.u32 %v819, 2139095040
        %v825 = vshrl.u32 %v824, 23
        %v826 = vsub.s32 %v825, 127
        %v827 = vand.u32 2147483647, %v819
        %v828 = vand.u32 %v827, 8388607
        %v829 = vor.u32 %v828, 8388608
        %v830 = vsub.s32 0, %v829
        %v831 = vadd.s32 %v826, 1
        %vm832 = vcmp.gt.s32.totalorder %v831, 0
        %v833 = vsel %vm832, %v831, 0
        %v834 = vshrl.u32 %v833, 5
        %v835 = vand.u32 %v833, 31
        %v836 = vsub.s32 32, %v835
        %v837 = vshrl.u32 683565275, %v836
        %v838 = vshll.u32 683565275, %v835
        %v839 = vshrl.u32 2475754826, %v836
        %v840 = vor.u32 %v838, %v839
        %v841 = vshll.u32 2475754826, %v835
        %v842 = vshrl.u32 2131351028, %v836
        %v843 = vor.u32 %v841, %v842
        %v844 = vshll.u32 2131351028, %v835
        %v845 = vshrl.u32 2102212464, %v836
        %v846 = vor.u32 %v844, %v845
        %v847 = vshll.u32 2102212464, %v835
        %v848 = vshrl.u32 920167782, %v836
        %v849 = vor.u32 %v847, %v848
        %v850 = vshll.u32 920167782, %v835
        %v851 = vshrl.u32 1326507024, %v836
        %v852 = vor.u32 %v850, %v851
        %vm853 = vcmp.lt.s32.totalorder %v834, 1
        %vm854 = vcmp.lt.s32.totalorder %v834, 2
        %vm855 = vcmp.lt.s32.totalorder %v834, 3
        %vm856 = vcmp.lt.s32.totalorder %v834, 4
        %v857 = vsel %vm853, %v837, %v840
        %v858 = vsel %vm856, %v846, 2102212464
        %v859 = vsel %vm855, %v843, %v858
        %v860 = vsel %vm854, %v857, %v859
        %v861 = vsel %vm853, %v840, %v843
        %v862 = vsel %vm856, %v849, 920167782
        %v863 = vsel %vm855, %v846, %v862
        %v864 = vsel %vm854, %v861, %v863
        %v865 = vsel %vm853, %v843, %v846
        %v866 = vsel %vm856, %v852, 1326507024
        %v867 = vsel %vm855, %v849, %v866
        %v868 = vsel %vm854, %v865, %v867
        %v869 = vshll.u32 %v829, 8
        %v870 = vmul.u32.u64.compose %v869, %v868
        %v871 = vextract.low.u32 %v870
        %v872 = vextract.high.u32 %v870
        %v873 = vmul.u32.u64.compose %v869, %v864
        %v874 = vextract.low.u32 %v873
        %v875 = vextract.high.u32 %v873
        %v876 = vmul.u32 %v869, %v860
        %v877 = vadd.s32 %v872, %v874
        %vm878 = vc.u32 %v872, %v874
        %v879 = vadd.s32 %v875, 1
        %v880 = vsel %vm878, %v879, %v875
        %v881 = vadd.s32 %v876, %v880
        %v882 = vadd.s32 %v881, 536870912
        %v883 = vshrl.u32 %v882, 30
        %v884 = vshll.u32 %v883, 30
        %v885 = vsub.s32 %v881, %v884
        %vm886 = vcmp.lt.s32.totalorder %v885, 0
        %v887 = vsub.s32 0, %v885
        %v888 = vsel %vm886, %v887, %v885
        %v889 = vclz %v888
        %v890 = vsub.s32 %v889, 2
        %vm891 = vcmp.gt.s32.totalorder 0, %v890
        %v892 = vsel %vm891, 0, %v890
        %v893 = vsub.s32 32, %v892
        %v894 = vshll.u32 %v885, %v892
        %v895 = vshrl.u32 %v877, %v893
        %v896 = vor.u32 %v894, %v895
        %v897 = vsub.s32 4294967266, %v892
        %v898 = vadd.s32 %v897, 127
        %v899 = vshll.u32 %v898, 23
        %v900 = vor.u32 4788187, %v899
        %v901 = vand.u32 2147483647, %v900
        %v903 = vcvt.s32.f32 %v896
        %v904 = vmul.f32 %v903, %v901
        %v905 = vxor.u32 %v904, 2147483648
        %v906 = vsel %vm823, %v905, %v904
        %v907 = vsub.s32 4, %v883
        %v908 = vsel %vm823, %v907, %v883
        %v909 = vsel %vm822, %v819, %v906
        %v910 = vsel %vm822, 0, %v908
        %v911 = vcosq.f32.pop %v909
        %v912 = vsinq.f32.pop %v909
        %vm913 = vweird.f32 %v819
        %v914 = vand.u32 %v910, 3
        %vm915 = vcmp.lt.s32.totalorder %v914, 2
        %vm916 = vcmp.eq.s32.totalorder %v914, 0
        %v917 = vxor.u32 %v912, 2147483648
        %v918 = vsel %vm916, %v911, %v917
        %vm919 = vcmp.eq.s32.totalorder %v914, 2
        %v920 = vxor.u32 %v911, 2147483648
        %v921 = vsel %vm919, %v920, %v912
        %v922 = vsel %vm915, %v918, %v921
        %v923 = vsel %vm913, nan, %v922
        %v924 = vand.u32 2147483647, %v820
        %vm925 = vcmp.le.f32.partialorder %v924, 0.7853982
        %vm926 = vcmp.lt.s32.totalorder %v820, 0
        %v927 = vand.u32 %v820, 2139095040
        %v928 = vshrl.u32 %v927, 23
        %v929 = vsub.s32 %v928, 127
        %v930 = vand.u32 2147483647, %v820
        %v931 = vand.u32 %v930, 8388607
        %v932 = vor.u32 %v931, 8388608
        %v933 = vsub.s32 0, %v932
        %v934 = vadd.s32 %v929, 1
        %vm935 = vcmp.gt.s32.totalorder %v934, 0
        %v936 = vsel %vm935, %v934, 0
        %v937 = vshrl.u32 %v936, 5
        %v938 = vand.u32 %v936, 31
        %v939 = vsub.s32 32, %v938
        %v940 = vshrl.u32 683565275, %v939
        %v941 = vshll.u32 683565275, %v938
        %v942 = vshrl.u32 2475754826, %v939
        %v943 = vor.u32 %v941, %v942
        %v944 = vshll.u32 2475754826, %v938
        %v945 = vshrl.u32 2131351028, %v939
        %v946 = vor.u32 %v944, %v945
        %v947 = vshll.u32 2131351028, %v938
        %v948 = vshrl.u32 2102212464, %v939
        %v949 = vor.u32 %v947, %v948
        %v950 = vshll.u32 2102212464, %v938
        %v951 = vshrl.u32 920167782, %v939
        %v952 = vor.u32 %v950, %v951
        %v953 = vshll.u32 920167782, %v938
        %v954 = vshrl.u32 1326507024, %v939
        %v955 = vor.u32 %v953, %v954
        %vm956 = vcmp.lt.s32.totalorder %v937, 1
        %vm957 = vcmp.lt.s32.totalorder %v937, 2
        %vm958 = vcmp.lt.s32.totalorder %v937, 3
        %vm959 = vcmp.lt.s32.totalorder %v937, 4
        %v960 = vsel %vm956, %v940, %v943
        %v961 = vsel %vm959, %v949, 2102212464
        %v962 = vsel %vm958, %v946, %v961
        %v963 = vsel %vm957, %v960, %v962
        %v964 = vsel %vm956, %v943, %v946
        %v965 = vsel %vm959, %v952, 920167782
        %v966 = vsel %vm958, %v949, %v965
        %v967 = vsel %vm957, %v964, %v966
        %v968 = vsel %vm956, %v946, %v949
        %v969 = vsel %vm959, %v955, 1326507024
        %v970 = vsel %vm958, %v952, %v969
        %v971 = vsel %vm957, %v968, %v970
        %v972 = vshll.u32 %v932, 8
        %v973 = vmul.u32.u64.compose %v972, %v971
        %v974 = vextract.low.u32 %v973
        %v975 = vextract.high.u32 %v973
        %v976 = vmul.u32.u64.compose %v972, %v967
        %v977 = vextract.low.u32 %v976
        %v978 = vextract.high.u32 %v976
        %v979 = vmul.u32 %v972, %v963
        %v980 = vadd.s32 %v975, %v977
        %vm981 = vc.u32 %v975, %v977
        %v982 = vadd.s32 %v978, 1
        %v983 = vsel %vm981, %v982, %v978
        %v984 = vadd.s32 %v979, %v983
        %v985 = vadd.s32 %v984, 536870912
        %v986 = vshrl.u32 %v985, 30
        %v987 = vshll.u32 %v986, 30
        %v988 = vsub.s32 %v984, %v987
        %vm989 = vcmp.lt.s32.totalorder %v988, 0
        %v990 = vsub.s32 0, %v988
        %v991 = vsel %vm989, %v990, %v988
        %v992 = vclz %v991
        %v993 = vsub.s32 %v992, 2
        %vm994 = vcmp.gt.s32.totalorder 0, %v993
        %v995 = vsel %vm994, 0, %v993
        %v996 = vsub.s32 32, %v995
        %v997 = vshll.u32 %v988, %v995
        %v998 = vshrl.u32 %v980, %v996
        %v999 = vor.u32 %v997, %v998
        %v1000 = vsub.s32 4294967266, %v995
        %v1001 = vadd.s32 %v1000, 127
        %v1002 = vshll.u32 %v1001, 23
        %v1003 = vor.u32 4788187, %v1002
        %v1004 = vand.u32 2147483647, %v1003
        %v1006 = vcvt.s32.f32 %v999
        %v1007 = vmul.f32 %v1006, %v1004
        %v1008 = vxor.u32 %v1007, 2147483648
        %v1009 = vsel %vm926, %v1008, %v1007
        %v1010 = vsub.s32 4, %v986
        %v1011 = vsel %vm926, %v1010, %v986
        %v1012 = vsel %vm925, %v820, %v1009
        %v1013 = vsel %vm925, 0, %v1011
        %v1014 = vcosq.f32.pop %v1012
        %v1015 = vsinq.f32.pop %v1012
        %vm1016 = vweird.f32 %v820
        %v1017 = vand.u32 %v1013, 3
        %vm1018 = vcmp.lt.s32.totalorder %v1017, 2
        %vm1019 = vcmp.eq.s32.totalorder %v1017, 0
        %v1020 = vxor.u32 %v1015, 2147483648
        %v1021 = vsel %vm1019, %v1014, %v1020
        %vm1022 = vcmp.eq.s32.totalorder %v1017, 2
        %v1023 = vxor.u32 %v1014, 2147483648
        %v1024 = vsel %vm1022, %v1023, %v1015
        %v1025 = vsel %vm1018, %v1021, %v1024
        %v1026 = vsel %vm1016, nan, %v1025
        %s1027 = scalar_lea.vmem %s164, 48 [#allocation5]
        %1028 = vst [vmem:[%s1027] sm:$0xff] %v923
        %1029 = vst [vmem:[%s1027 + $0x8] sm:$0xff] %v1026
        %s1030 = scalar_lea.vmem %s146, 80 [#allocation2]
        %v1031 = vld [vmem:[%s1030] sm:$0xff]
        %v1032 = vld [vmem:[%s1030 + $0x8] sm:$0xff]
        %v1033 = vld [vmem:[%s146] sm:$0xff]
        %v1034 = vld [vmem:[%s146 + $0x8] sm:$0xff]
        %v1035 = vsub.f32 %v1031, %v1033
        %v1036 = vsub.f32 %v1032, %v1034
        %v1037 = vand.u32 2147483647, %v1035
        %vm1038 = vcmp.le.f32.partialorder %v1037, 0.7853982
        %vm1039 = vcmp.lt.s32.totalorder %v1035, 0
        %v1040 = vand.u32 %v1035, 2139095040
        %v1041 = vshrl.u32 %v1040, 23
        %v1042 = vsub.s32 %v1041, 127
        %v1043 = vand.u32 2147483647, %v1035
        %v1044 = vand.u32 %v1043, 8388607
        %v1045 = vor.u32 %v1044, 8388608
        %v1046 = vsub.s32 0, %v1045
        %v1047 = vadd.s32 %v1042, 1
        %vm1048 = vcmp.gt.s32.totalorder %v1047, 0
        %v1049 = vsel %vm1048, %v1047, 0
        %v1050 = vshrl.u32 %v1049, 5
        %v1051 = vand.u32 %v1049, 31
        %v1052 = vsub.s32 32, %v1051
        %v1053 = vshrl.u32 683565275, %v1052
        %v1054 = vshll.u32 683565275, %v1051
        %v1055 = vshrl.u32 2475754826, %v1052
        %v1056 = vor.u32 %v1054, %v1055
        %v1057 = vshll.u32 2475754826, %v1051
        %v1058 = vshrl.u32 2131351028, %v1052
        %v1059 = vor.u32 %v1057, %v1058
        %v1060 = vshll.u32 2131351028, %v1051
        %v1061 = vshrl.u32 2102212464, %v1052
        %v1062 = vor.u32 %v1060, %v1061
        %v1063 = vshll.u32 2102212464, %v1051
        %v1064 = vshrl.u32 920167782, %v1052
        %v1065 = vor.u32 %v1063, %v1064
        %v1066 = vshll.u32 920167782, %v1051
        %v1067 = vshrl.u32 1326507024, %v1052
        %v1068 = vor.u32 %v1066, %v1067
        %vm1069 = vcmp.lt.s32.totalorder %v1050, 1
        %vm1070 = vcmp.lt.s32.totalorder %v1050, 2
        %vm1071 = vcmp.lt.s32.totalorder %v1050, 3
        %vm1072 = vcmp.lt.s32.totalorder %v1050, 4
        %v1073 = vsel %vm1069, %v1053, %v1056
        %v1074 = vsel %vm1072, %v1062, 2102212464
        %v1075 = vsel %vm1071, %v1059, %v1074
        %v1076 = vsel %vm1070, %v1073, %v1075
        %v1077 = vsel %vm1069, %v1056, %v1059
        %v1078 = vsel %vm1072, %v1065, 920167782
        %v1079 = vsel %vm1071, %v1062, %v1078
        %v1080 = vsel %vm1070, %v1077, %v1079
        %v1081 = vsel %vm1069, %v1059, %v1062
        %v1082 = vsel %vm1072, %v1068, 1326507024
        %v1083 = vsel %vm1071, %v1065, %v1082
        %v1084 = vsel %vm1070, %v1081, %v1083
        %v1085 = vshll.u32 %v1045, 8
        %v1086 = vmul.u32.u64.compose %v1085, %v1084
        %v1087 = vextract.low.u32 %v1086
        %v1088 = vextract.high.u32 %v1086
        %v1089 = vmul.u32.u64.compose %v1085, %v1080
        %v1090 = vextract.low.u32 %v1089
        %v1091 = vextract.high.u32 %v1089
        %v1092 = vmul.u32 %v1085, %v1076
        %v1093 = vadd.s32 %v1088, %v1090
        %vm1094 = vc.u32 %v1088, %v1090
        %v1095 = vadd.s32 %v1091, 1
        %v1096 = vsel %vm1094, %v1095, %v1091
        %v1097 = vadd.s32 %v1092, %v1096
        %v1098 = vadd.s32 %v1097, 536870912
        %v1099 = vshrl.u32 %v1098, 30
        %v1100 = vshll.u32 %v1099, 30
        %v1101 = vsub.s32 %v1097, %v1100
        %vm1102 = vcmp.lt.s32.totalorder %v1101, 0
        %v1103 = vsub.s32 0, %v1101
        %v1104 = vsel %vm1102, %v1103, %v1101
        %v1105 = vclz %v1104
        %v1106 = vsub.s32 %v1105, 2
        %vm1107 = vcmp.gt.s32.totalorder 0, %v1106
        %v1108 = vsel %vm1107, 0, %v1106
        %v1109 = vsub.s32 32, %v1108
        %v1110 = vshll.u32 %v1101, %v1108
        %v1111 = vshrl.u32 %v1093, %v1109
        %v1112 = vor.u32 %v1110, %v1111
        %v1113 = vsub.s32 4294967266, %v1108
        %v1114 = vadd.s32 %v1113, 127
        %v1115 = vshll.u32 %v1114, 23
        %v1116 = vor.u32 4788187, %v1115
        %v1117 = vand.u32 2147483647, %v1116
        %v1119 = vcvt.s32.f32 %v1112
        %v1120 = vmul.f32 %v1119, %v1117
        %v1121 = vxor.u32 %v1120, 2147483648
        %v1122 = vsel %vm1039, %v1121, %v1120
        %v1123 = vsub.s32 4, %v1099
        %v1124 = vsel %vm1039, %v1123, %v1099
        %v1125 = vsel %vm1038, %v1035, %v1122
        %v1126 = vsel %vm1038, 0, %v1124
        %v1127 = vcosq.f32.pop %v1125
        %v1128 = vsinq.f32.pop %v1125
        %vm1129 = vweird.f32 %v1035
        %v1130 = vand.u32 %v1126, 3
        %vm1131 = vcmp.lt.s32.totalorder %v1130, 2
        %vm1132 = vcmp.eq.s32.totalorder %v1130, 0
        %v1133 = vxor.u32 %v1128, 2147483648
        %v1134 = vsel %vm1132, %v1127, %v1133
        %vm1135 = vcmp.eq.s32.totalorder %v1130, 2
        %v1136 = vxor.u32 %v1127, 2147483648
        %v1137 = vsel %vm1135, %v1136, %v1128
        %v1138 = vsel %vm1131, %v1134, %v1137
        %v1139 = vsel %vm1129, nan, %v1138
        %v1140 = vand.u32 2147483647, %v1036
        %vm1141 = vcmp.le.f32.partialorder %v1140, 0.7853982
        %vm1142 = vcmp.lt.s32.totalorder %v1036, 0
        %v1143 = vand.u32 %v1036, 2139095040
        %v1144 = vshrl.u32 %v1143, 23
        %v1145 = vsub.s32 %v1144, 127
        %v1146 = vand.u32 2147483647, %v1036
        %v1147 = vand.u32 %v1146, 8388607
        %v1148 = vor.u32 %v1147, 8388608
        %v1149 = vsub.s32 0, %v1148
        %v1150 = vadd.s32 %v1145, 1
        %vm1151 = vcmp.gt.s32.totalorder %v1150, 0
        %v1152 = vsel %vm1151, %v1150, 0
        %v1153 = vshrl.u32 %v1152, 5
        %v1154 = vand.u32 %v1152, 31
        %v1155 = vsub.s32 32, %v1154
        %v1156 = vshrl.u32 683565275, %v1155
        %v1157 = vshll.u32 683565275, %v1154
        %v1158 = vshrl.u32 2475754826, %v1155
        %v1159 = vor.u32 %v1157, %v1158
        %v1160 = vshll.u32 2475754826, %v1154
        %v1161 = vshrl.u32 2131351028, %v1155
        %v1162 = vor.u32 %v1160, %v1161
        %v1163 = vshll.u32 2131351028, %v1154
        %v1164 = vshrl.u32 2102212464, %v1155
        %v1165 = vor.u32 %v1163, %v1164
        %v1166 = vshll.u32 2102212464, %v1154
        %v1167 = vshrl.u32 920167782, %v1155
        %v1168 = vor.u32 %v1166, %v1167
        %v1169 = vshll.u32 920167782, %v1154
        %v1170 = vshrl.u32 1326507024, %v1155
        %v1171 = vor.u32 %v1169, %v1170
        %vm1172 = vcmp.lt.s32.totalorder %v1153, 1
        %vm1173 = vcmp.lt.s32.totalorder %v1153, 2
        %vm1174 = vcmp.lt.s32.totalorder %v1153, 3
        %vm1175 = vcmp.lt.s32.totalorder %v1153, 4
        %v1176 = vsel %vm1172, %v1156, %v1159
        %v1177 = vsel %vm1175, %v1165, 2102212464
        %v1178 = vsel %vm1174, %v1162, %v1177
        %v1179 = vsel %vm1173, %v1176, %v1178
        %v1180 = vsel %vm1172, %v1159, %v1162
        %v1181 = vsel %vm1175, %v1168, 920167782
        %v1182 = vsel %vm1174, %v1165, %v1181
        %v1183 = vsel %vm1173, %v1180, %v1182
        %v1184 = vsel %vm1172, %v1162, %v1165
        %v1185 = vsel %vm1175, %v1171, 1326507024
        %v1186 = vsel %vm1174, %v1168, %v1185
        %v1187 = vsel %vm1173, %v1184, %v1186
        %v1188 = vshll.u32 %v1148, 8
        %v1189 = vmul.u32.u64.compose %v1188, %v1187
        %v1190 = vextract.low.u32 %v1189
        %v1191 = vextract.high.u32 %v1189
        %v1192 = vmul.u32.u64.compose %v1188, %v1183
        %v1193 = vextract.low.u32 %v1192
        %v1194 = vextract.high.u32 %v1192
        %v1195 = vmul.u32 %v1188, %v1179
        %v1196 = vadd.s32 %v1191, %v1193
        %vm1197 = vc.u32 %v1191, %v1193
        %v1198 = vadd.s32 %v1194, 1
        %v1199 = vsel %vm1197, %v1198, %v1194
        %v1200 = vadd.s32 %v1195, %v1199
        %v1201 = vadd.s32 %v1200, 536870912
        %v1202 = vshrl.u32 %v1201, 30
        %v1203 = vshll.u32 %v1202, 30
        %v1204 = vsub.s32 %v1200, %v1203
        %vm1205 = vcmp.lt.s32.totalorder %v1204, 0
        %v1206 = vsub.s32 0, %v1204
        %v1207 = vsel %vm1205, %v1206, %v1204
        %v1208 = vclz %v1207
        %v1209 = vsub.s32 %v1208, 2
        %vm1210 = vcmp.gt.s32.totalorder 0, %v1209
        %v1211 = vsel %vm1210, 0, %v1209
        %v1212 = vsub.s32 32, %v1211
        %v1213 = vshll.u32 %v1204, %v1211
        %v1214 = vshrl.u32 %v1196, %v1212
        %v1215 = vor.u32 %v1213, %v1214
        %v1216 = vsub.s32 4294967266, %v1211
        %v1217 = vadd.s32 %v1216, 127
        %v1218 = vshll.u32 %v1217, 23
        %v1219 = vor.u32 4788187, %v1218
        %v1220 = vand.u32 2147483647, %v1219
        %v1222 = vcvt.s32.f32 %v1215
        %v1223 = vmul.f32 %v1222, %v1220
        %v1224 = vxor.u32 %v1223, 2147483648
        %v1225 = vsel %vm1142, %v1224, %v1223
        %v1226 = vsub.s32 4, %v1202
        %v1227 = vsel %vm1142, %v1226, %v1202
        %v1228 = vsel %vm1141, %v1036, %v1225
        %v1229 = vsel %vm1141, 0, %v1227
        %v1230 = vcosq.f32.pop %v1228
        %v1231 = vsinq.f32.pop %v1228
        %vm1232 = vweird.f32 %v1036
        %v1233 = vand.u32 %v1229, 3
        %vm1234 = vcmp.lt.s32.totalorder %v1233, 2
        %vm1235 = vcmp.eq.s32.totalorder %v1233, 0
        %v1236 = vxor.u32 %v1231, 2147483648
        %v1237 = vsel %vm1235, %v1230, %v1236
        %vm1238 = vcmp.eq.s32.totalorder %v1233, 2
        %v1239 = vxor.u32 %v1230, 2147483648
        %v1240 = vsel %vm1238, %v1239, %v1231
        %v1241 = vsel %vm1234, %v1237, %v1240
        %v1242 = vsel %vm1232, nan, %v1241
        %s1243 = scalar_lea.vmem %s164, 64 [#allocation5]
        %1244 = vst [vmem:[%s1243] sm:$0xff] %v1139
        %1245 = vst [vmem:[%s1243 + $0x8] sm:$0xff] %v1242
        %s1246 = scalar_lea.vmem %s146, 96 [#allocation2]
        %v1247 = vld [vmem:[%s1246] sm:$0xff]
        %v1248 = vld [vmem:[%s1246 + $0x8] sm:$0xff]
        %v1249 = vld [vmem:[%s146] sm:$0xff]
        %v1250 = vld [vmem:[%s146 + $0x8] sm:$0xff]
        %v1251 = vsub.f32 %v1247, %v1249
        %v1252 = vsub.f32 %v1248, %v1250
        %v1253 = vand.u32 2147483647, %v1251
        %vm1254 = vcmp.le.f32.partialorder %v1253, 0.7853982
        %vm1255 = vcmp.lt.s32.totalorder %v1251, 0
        %v1256 = vand.u32 %v1251, 2139095040
        %v1257 = vshrl.u32 %v1256, 23
        %v1258 = vsub.s32 %v1257, 127
        %v1259 = vand.u32 2147483647, %v1251
        %v1260 = vand.u32 %v1259, 8388607
        %v1261 = vor.u32 %v1260, 8388608
        %v1262 = vsub.s32 0, %v1261
        %v1263 = vadd.s32 %v1258, 1
        %vm1264 = vcmp.gt.s32.totalorder %v1263, 0
        %v1265 = vsel %vm1264, %v1263, 0
        %v1266 = vshrl.u32 %v1265, 5
        %v1267 = vand.u32 %v1265, 31
        %v1268 = vsub.s32 32, %v1267
        %v1269 = vshrl.u32 683565275, %v1268
        %v1270 = vshll.u32 683565275, %v1267
        %v1271 = vshrl.u32 2475754826, %v1268
        %v1272 = vor.u32 %v1270, %v1271
        %v1273 = vshll.u32 2475754826, %v1267
        %v1274 = vshrl.u32 2131351028, %v1268
        %v1275 = vor.u32 %v1273, %v1274
        %v1276 = vshll.u32 2131351028, %v1267
        %v1277 = vshrl.u32 2102212464, %v1268
        %v1278 = vor.u32 %v1276, %v1277
        %v1279 = vshll.u32 2102212464, %v1267
        %v1280 = vshrl.u32 920167782, %v1268
        %v1281 = vor.u32 %v1279, %v1280
        %v1282 = vshll.u32 920167782, %v1267
        %v1283 = vshrl.u32 1326507024, %v1268
        %v1284 = vor.u32 %v1282, %v1283
        %vm1285 = vcmp.lt.s32.totalorder %v1266, 1
        %vm1286 = vcmp.lt.s32.totalorder %v1266, 2
        %vm1287 = vcmp.lt.s32.totalorder %v1266, 3
        %vm1288 = vcmp.lt.s32.totalorder %v1266, 4
        %v1289 = vsel %vm1285, %v1269, %v1272
        %v1290 = vsel %vm1288, %v1278, 2102212464
        %v1291 = vsel %vm1287, %v1275, %v1290
        %v1292 = vsel %vm1286, %v1289, %v1291
        %v1293 = vsel %vm1285, %v1272, %v1275
        %v1294 = vsel %vm1288, %v1281, 920167782
        %v1295 = vsel %vm1287, %v1278, %v1294
        %v1296 = vsel %vm1286, %v1293, %v1295
        %v1297 = vsel %vm1285, %v1275, %v1278
        %v1298 = vsel %vm1288, %v1284, 1326507024
        %v1299 = vsel %vm1287, %v1281, %v1298
        %v1300 = vsel %vm1286, %v1297, %v1299
        %v1301 = vshll.u32 %v1261, 8
        %v1302 = vmul.u32.u64.compose %v1301, %v1300
        %v1303 = vextract.low.u32 %v1302
        %v1304 = vextract.high.u32 %v1302
        %v1305 = vmul.u32.u64.compose %v1301, %v1296
        %v1306 = vextract.low.u32 %v1305
        %v1307 = vextract.high.u32 %v1305
        %v1308 = vmul.u32 %v1301, %v1292
        %v1309 = vadd.s32 %v1304, %v1306
        %vm1310 = vc.u32 %v1304, %v1306
        %v1311 = vadd.s32 %v1307, 1
        %v1312 = vsel %vm1310, %v1311, %v1307
        %v1313 = vadd.s32 %v1308, %v1312
        %v1314 = vadd.s32 %v1313, 536870912
        %v1315 = vshrl.u32 %v1314, 30
        %v1316 = vshll.u32 %v1315, 30
        %v1317 = vsub.s32 %v1313, %v1316
        %vm1318 = vcmp.lt.s32.totalorder %v1317, 0
        %v1319 = vsub.s32 0, %v1317
        %v1320 = vsel %vm1318, %v1319, %v1317
        %v1321 = vclz %v1320
        %v1322 = vsub.s32 %v1321, 2
        %vm1323 = vcmp.gt.s32.totalorder 0, %v1322
        %v1324 = vsel %vm1323, 0, %v1322
        %v1325 = vsub.s32 32, %v1324
        %v1326 = vshll.u32 %v1317, %v1324
        %v1327 = vshrl.u32 %v1309, %v1325
        %v1328 = vor.u32 %v1326, %v1327
        %v1329 = vsub.s32 4294967266, %v1324
        %v1330 = vadd.s32 %v1329, 127
        %v1331 = vshll.u32 %v1330, 23
        %v1332 = vor.u32 4788187, %v1331
        %v1333 = vand.u32 2147483647, %v1332
        %v1335 = vcvt.s32.f32 %v1328
        %v1336 = vmul.f32 %v1335, %v1333
        %v1337 = vxor.u32 %v1336, 2147483648
        %v1338 = vsel %vm1255, %v1337, %v1336
        %v1339 = vsub.s32 4, %v1315
        %v1340 = vsel %vm1255, %v1339, %v1315
        %v1341 = vsel %vm1254, %v1251, %v1338
        %v1342 = vsel %vm1254, 0, %v1340
        %v1343 = vcosq.f32.pop %v1341
        %v1344 = vsinq.f32.pop %v1341
        %vm1345 = vweird.f32 %v1251
        %v1346 = vand.u32 %v1342, 3
        %vm1347 = vcmp.lt.s32.totalorder %v1346, 2
        %vm1348 = vcmp.eq.s32.totalorder %v1346, 0
        %v1349 = vxor.u32 %v1344, 2147483648
        %v1350 = vsel %vm1348, %v1343, %v1349
        %vm1351 = vcmp.eq.s32.totalorder %v1346, 2
        %v1352 = vxor.u32 %v1343, 2147483648
        %v1353 = vsel %vm1351, %v1352, %v1344
        %v1354 = vsel %vm1347, %v1350, %v1353
        %v1355 = vsel %vm1345, nan, %v1354
        %v1356 = vand.u32 2147483647, %v1252
        %vm1357 = vcmp.le.f32.partialorder %v1356, 0.7853982
        %vm1358 = vcmp.lt.s32.totalorder %v1252, 0
        %v1359 = vand.u32 %v1252, 2139095040
        %v1360 = vshrl.u32 %v1359, 23
        %v1361 = vsub.s32 %v1360, 127
        %v1362 = vand.u32 2147483647, %v1252
        %v1363 = vand.u32 %v1362, 8388607
        %v1364 = vor.u32 %v1363, 8388608
        %v1365 = vsub.s32 0, %v1364
        %v1366 = vadd.s32 %v1361, 1
        %vm1367 = vcmp.gt.s32.totalorder %v1366, 0
        %v1368 = vsel %vm1367, %v1366, 0
        %v1369 = vshrl.u32 %v1368, 5
        %v1370 = vand.u32 %v1368, 31
        %v1371 = vsub.s32 32, %v1370
        %v1372 = vshrl.u32 683565275, %v1371
        %v1373 = vshll.u32 683565275, %v1370
        %v1374 = vshrl.u32 2475754826, %v1371
        %v1375 = vor.u32 %v1373, %v1374
        %v1376 = vshll.u32 2475754826, %v1370
        %v1377 = vshrl.u32 2131351028, %v1371
        %v1378 = vor.u32 %v1376, %v1377
        %v1379 = vshll.u32 2131351028, %v1370
        %v1380 = vshrl.u32 2102212464, %v1371
        %v1381 = vor.u32 %v1379, %v1380
        %v1382 = vshll.u32 2102212464, %v1370
        %v1383 = vshrl.u32 920167782, %v1371
        %v1384 = vor.u32 %v1382, %v1383
        %v1385 = vshll.u32 920167782, %v1370
        %v1386 = vshrl.u32 1326507024, %v1371
        %v1387 = vor.u32 %v1385, %v1386
        %vm1388 = vcmp.lt.s32.totalorder %v1369, 1
        %vm1389 = vcmp.lt.s32.totalorder %v1369, 2
        %vm1390 = vcmp.lt.s32.totalorder %v1369, 3
        %vm1391 = vcmp.lt.s32.totalorder %v1369, 4
        %v1392 = vsel %vm1388, %v1372, %v1375
        %v1393 = vsel %vm1391, %v1381, 2102212464
        %v1394 = vsel %vm1390, %v1378, %v1393
        %v1395 = vsel %vm1389, %v1392, %v1394
        %v1396 = vsel %vm1388, %v1375, %v1378
        %v1397 = vsel %vm1391, %v1384, 920167782
        %v1398 = vsel %vm1390, %v1381, %v1397
        %v1399 = vsel %vm1389, %v1396, %v1398
        %v1400 = vsel %vm1388, %v1378, %v1381
        %v1401 = vsel %vm1391, %v1387, 1326507024
        %v1402 = vsel %vm1390, %v1384, %v1401
        %v1403 = vsel %vm1389, %v1400, %v1402
        %v1404 = vshll.u32 %v1364, 8
        %v1405 = vmul.u32.u64.compose %v1404, %v1403
        %v1406 = vextract.low.u32 %v1405
        %v1407 = vextract.high.u32 %v1405
        %v1408 = vmul.u32.u64.compose %v1404, %v1399
        %v1409 = vextract.low.u32 %v1408
        %v1410 = vextract.high.u32 %v1408
        %v1411 = vmul.u32 %v1404, %v1395
        %v1412 = vadd.s32 %v1407, %v1409
        %vm1413 = vc.u32 %v1407, %v1409
        %v1414 = vadd.s32 %v1410, 1
        %v1415 = vsel %vm1413, %v1414, %v1410
        %v1416 = vadd.s32 %v1411, %v1415
        %v1417 = vadd.s32 %v1416, 536870912
        %v1418 = vshrl.u32 %v1417, 30
        %v1419 = vshll.u32 %v1418, 30
        %v1420 = vsub.s32 %v1416, %v1419
        %vm1421 = vcmp.lt.s32.totalorder %v1420, 0
        %v1422 = vsub.s32 0, %v1420
        %v1423 = vsel %vm1421, %v1422, %v1420
        %v1424 = vclz %v1423
        %v1425 = vsub.s32 %v1424, 2
        %vm1426 = vcmp.gt.s32.totalorder 0, %v1425
        %v1427 = vsel %vm1426, 0, %v1425
        %v1428 = vsub.s32 32, %v1427
        %v1429 = vshll.u32 %v1420, %v1427
        %v1430 = vshrl.u32 %v1412, %v1428
        %v1431 = vor.u32 %v1429, %v1430
        %v1432 = vsub.s32 4294967266, %v1427
        %v1433 = vadd.s32 %v1432, 127
        %v1434 = vshll.u32 %v1433, 23
        %v1435 = vor.u32 4788187, %v1434
        %v1436 = vand.u32 2147483647, %v1435
        %v1438 = vcvt.s32.f32 %v1431
        %v1439 = vmul.f32 %v1438, %v1436
        %v1440 = vxor.u32 %v1439, 2147483648
        %v1441 = vsel %vm1358, %v1440, %v1439
        %v1442 = vsub.s32 4, %v1418
        %v1443 = vsel %vm1358, %v1442, %v1418
        %v1444 = vsel %vm1357, %v1252, %v1441
        %v1445 = vsel %vm1357, 0, %v1443
        %v1446 = vcosq.f32.pop %v1444
        %v1447 = vsinq.f32.pop %v1444
        %vm1448 = vweird.f32 %v1252
        %v1449 = vand.u32 %v1445, 3
        %vm1450 = vcmp.lt.s32.totalorder %v1449, 2
        %vm1451 = vcmp.eq.s32.totalorder %v1449, 0
        %v1452 = vxor.u32 %v1447, 2147483648
        %v1453 = vsel %vm1451, %v1446, %v1452
        %vm1454 = vcmp.eq.s32.totalorder %v1449, 2
        %v1455 = vxor.u32 %v1446, 2147483648
        %v1456 = vsel %vm1454, %v1455, %v1447
        %v1457 = vsel %vm1450, %v1453, %v1456
        %v1458 = vsel %vm1448, nan, %v1457
        %s1459 = scalar_lea.vmem %s164, 80 [#allocation5]
        %1460 = vst [vmem:[%s1459] sm:$0xff] %v1355
        %1461 = vst [vmem:[%s1459 + $0x8] sm:$0xff] %v1458
        %s1462 = sand.u32 %s79, 1
        %s1463 = scalar_lea.sflag [#allocation4], %s1462
        %s1464 = sand.u32 %s79, 1
        %s1465 = smul.addr %s1464, 96
        %s1466 = scalar_lea.vmem [#allocation5], %s1465
        // Predicated region
        $region29: #{tpu_custom_call.1} parent=23 // pred_check
          %p1467 = pneg %p89
        $region30: #{tpu_custom_call.1} parent=23 // pred_check_branch
          %1469 = sbr.rel (%p1467) target = $region32
        $region31: #{tpu_custom_call.1} parent=23 // pred_region
          %s1470 = smul.u32 2, %s24
          %s1472 = ssub.s32 1536, 1536
          %1473 = vsyncadd %s1463, %s1472
          %s1474 = sadd.s32 %s25, %s1470
          %s1475 = smul.addr %s23, 12
          %s1476 = sadd.s32 %s1474, %s1475
          %s1477 = smul.addr %s1476, 128
          %s1478 = scalar_lea.hbm %s1, %s1477
          %s1479 = sshll.u32 %s1466, 4
          %s1480 = int_to_ptr.vmem [resolvable:$true] %s1479
          %1485 = dma.vmem_to_hbm [thread:$0]  %s1480, 1536, %s1478, %s1463, 128, 128, 8
        $region32: #{tpu_custom_call.1} parent=23 // pred_fallthru
          _
      $region24: #{tpu_custom_call.1} parent=5 // pred_fallthru
        _
      %p1486 = scmp.le.s32.totalorder 2, %s13
      // Predicated region
      $region33: #{tpu_custom_call.1} parent=5 // pred_check
        %p1487 = pneg %p1486
      $region34: #{tpu_custom_call.1} parent=5 // pred_check_branch
        %1489 = sbr.rel (%p1487) target = $region36
      $region35: #{tpu_custom_call.1} parent=5 // pred_region
        %s1490 = ssub.s32 %s13, 2
        // Predicated region
        $region37: #{tpu_custom_call.1} parent=35 // pred_check
          %p1491 = pneg %p95
        $region38: #{tpu_custom_call.1} parent=35 // pred_check_branch
          %1493 = sbr.rel (%p1491) target = $region40
        $region39: #{tpu_custom_call.1} parent=35 // pred_region
          %s1494 = sand.u32 %s80, 1
          %s1495 = scalar_lea.sflag [#allocation4], %s1494
          %s1496 = sand.u32 %s80, 1
          %s1497 = smul.addr %s1496, 96
          %s1498 = scalar_lea.vmem [#allocation5], %s1497
          %1499 = dma.done %s1495, 1536
        $region40: #{tpu_custom_call.1} parent=35 // pred_fallthru
          _
      $region36: #{tpu_custom_call.1} parent=5 // pred_fallthru
        _
    $region6: #{tpu_custom_call.1} parent=1 // loop_footer
      %s17 = sadd.s32 1, %s13
    $region7: #{tpu_custom_call.1} parent=1 // loop_footer_branch
      %12 = sbr.rel target = $region3
    $region8: #{tpu_custom_call.1} parent=1 // loop_exit
      _
    %1500 = vsyncpa [#allocation3], 1
    %s1501 = scalar_lea.sflag [#allocation3], 1
    %1502 = vsyncpa %s1501, 1
    %1503 = vsyncpa [#allocation4], 1
    %s1504 = scalar_lea.sflag [#allocation4], 1
    %1505 = vsyncpa %s1504, 1

</llo_original>
